<compile_context>
chip_gen: v6e
topology: v6e:2x2x1
jax: 0.10.0
libtpu: 0.0.40
codegen_flags: <defaults>
</compile_context>

<pallas_src>
import functools

import jax
import jax.numpy as jnp
from jax.experimental import pallas as pl
from jax.experimental.pallas import tpu as pltpu


# ------------------------------ fused kernel ---------------------------------

def _fused_kernel(*refs, n_layers, hidden):
    L, H = n_layers, hidden
    it = iter(refs)
    x_ref = next(it)                          # (seq, num_in)      last-batch-row input
    c_ref = next(it)                          # (seq, aug)
    wih0_ref = next(it)                       # (num_in, 4H)       layer-0 input weights
    b0_ref = next(it)                         # (1, 4H)            layer-0 bias (ih + hh)
    rhs_ref = next(it)                        # (L*H, L*4H)        fused block RHS
    b_rest_refs = [next(it) for _ in range(L - 1)]   # (1, 4H) per layer 1..L-1
    w1h_ref = next(it)                        # (H, nh)
    w1c_ref = next(it)                        # (aug, nh)
    b1_ref = next(it)                         # (1, nh)
    wmv_ref = next(it)                        # (nh, 2)   [W_mean | W_var]
    bmv_ref = next(it)                        # (1, 2)
    out_ref = next(it)                        # (seq, 2)
    h_seq = next(it)                          # VMEM scratch (seq, H): last-layer outputs

    seq, num_in = x_ref.shape

    # ---- layer-0 input projection, hoisted over the whole sequence ----------
    x = x_ref[...]
    if num_in == 1:
        # K=1 matmul would pad K to 128/256 on the MXU; a VPU broadcast mul is free.
        gx0 = x * wih0_ref[...] + b0_ref[...]                       # (seq, 4H)
    else:
        gx0 = jnp.dot(x, wih0_ref[...],
                      preferred_element_type=jnp.float32) + b0_ref[...]

    block_rhs = rhs_ref[...]                                        # (L*H, L*4H)
    b_rest = [r[...] for r in b_rest_refs]

    h = [jnp.zeros((1, H), jnp.float32) for _ in range(L)]          # per-layer hidden
    c_st = [jnp.zeros((1, H), jnp.float32) for _ in range(L)]       # per-layer cell

    # ---- wavefront recurrence: wave w runs layer l at step t = w - l ---------
    # One fused matmul per wave:  [h1_{w-1}, ..., hL_{w-L}] @ block_rhs
    # where block_rhs[row l, col l] = Whh_l and block_rhs[row l-1, col l] = Wih_l.
    for w in range(seq + L - 1):                                    # static unroll
        lhs = h[0] if L == 1 else jnp.concatenate(h, axis=1)        # (1, L*H)
        rec = jnp.dot(lhs, block_rhs,
                      preferred_element_type=jnp.float32)           # (1, L*4H)
        new_h = list(h)
        for l in range(L):
            t = w - l
            if t < 0 or t >= seq:                                   # static boundary skip
                continue
            if l == 0:
                gates = gx0[t:t + 1, :] + rec[:, 0:4 * H]
            else:
                gates = rec[:, l * 4 * H:(l + 1) * 4 * H] + b_rest[l - 1]
            # One full-width sigmoid + one full-width tanh (each 1 vreg -> 1 EUP push),
            # then static 32-lane slices -> i/f/o from sigmoid, g from tanh.
            sg = jax.nn.sigmoid(gates)                              # (1, 4H)
            tg = jnp.tanh(gates)                                    # (1, 4H)
            i_g = sg[:, 0:H]
            f_g = sg[:, H:2 * H]
            o_g = sg[:, 3 * H:4 * H]
            g_g = tg[:, 2 * H:3 * H]
            c_new = f_g * c_st[l] + i_g * g_g
            h_new = o_g * jnp.tanh(c_new)                           # third EUP push
            c_st[l] = c_new
            new_h[l] = h_new
            if l == L - 1:
                h_seq[t:t + 1, :] = h_new                           # static row store
        h = new_h

    # ---- MLP head ------------------------------------------------------------
    # linear1 split as feat @ W1 = y_last @ W1_h + c @ W1_c  (no lane concat).
    cur = h_seq[...]                                                # (seq, H)
    hid = (jnp.dot(cur, w1h_ref[...], preferred_element_type=jnp.float32)
           + jnp.dot(c_ref[...], w1c_ref[...], preferred_element_type=jnp.float32)
           + b1_ref[...])
    hid = jnp.maximum(hid, 0.0)                                     # relu; Dropout(0)=id

    # Mean/var heads fused into one (nh, 2) matmul.
    mv = jnp.dot(hid, wmv_ref[...], preferred_element_type=jnp.float32) + bmv_ref[...]
    col = jax.lax.broadcasted_iota(jnp.int32, mv.shape, 1)
    out_ref[...] = jnp.where(col == 0, jnp.tanh(mv), jax.nn.softplus(mv) + 1e-5)


def _fused_call(x_last, c, kp):
    seq, _ = x_last.shape
    L = len(kp["b_rest"]) + 1
    H = kp["w1h_t"].shape[0]

    inputs = ([x_last, c, kp["wih0_t"], kp["b0"], kp["block_rhs"]]
              + list(kp["b_rest"])
              + [kp["w1h_t"], kp["w1c_t"], kp["b1"], kp["wmv_t"], kp["bmv"]])
    in_specs = [pl.BlockSpec(a.shape, lambda i: (0, 0)) for a in inputs]  # all 2-D

    kernel = functools.partial(_fused_kernel, n_layers=L, hidden=H)
    return pl.pallas_call(
        kernel,
        out_shape=jax.ShapeDtypeStruct((seq, 2), jnp.float32),
        grid=(1,),
        in_specs=in_specs,
        out_specs=pl.BlockSpec((seq, 2), lambda i: (0, 0)),
        scratch_shapes=[pltpu.VMEM((seq, H), jnp.float32)],
        compiler_params=pltpu.CompilerParams(
            dimension_semantics=("arbitrary",),
            vmem_limit_bytes=32 * 1024 * 1024,   # explicit guard (v5e default is 16 MiB)
        ),
    )(*inputs)


# ------------------------------ forward + params ------------------------------

def uncertain_lstm_forward(kparams, x, c):
    # PyTorch does x[:, -1] on the (seq, batch, H) LSTM output -> last BATCH row.
    # LSTM batch rows are independent (zero init state), so running the recurrence
    # only on x[:, -1, :] is exact and drops all dead batch work.
    x_last = x[:, -1, :]                                            # (seq, num_in)
    out = _fused_call(x_last, c, kparams)                           # (seq, 2)
    return out[:, 0:1], out[:, 1:2]


def prepare_params(params):
    """One-time host-side prep of kernel-ready parameters (hoisted out of forward)."""
    lstm = params["lstm"]
    L = len(lstm)
    H = lstm[0]["whh_t"].shape[0]

    # Block upper-bidiagonal RHS: row block r, col block c ->
    #   Whh_r if c == r, Wih_c if c == r + 1, else 0.
    rows = []
    for r in range(L):
        row = []
        for cidx in range(L):
            if cidx == r:
                row.append(lstm[r]["whh_t"])                        # (H, 4H)
            elif cidx == r + 1:
                row.append(lstm[cidx]["wih_t"])                     # (H, 4H)
            else:
                row.append(jnp.zeros((H, 4 * H), jnp.float32))
        rows.append(jnp.concatenate(row, axis=1))
    block_rhs = jnp.concatenate(rows, axis=0)                       # (L*H, L*4H)

    return {
        "wih0_t": lstm[0]["wih_t"],                                 # (num_in, 4H)
        "b0": lstm[0]["b"],                                         # (1, 4H)
        "block_rhs": block_rhs,
        "b_rest": [lstm[l]["b"] for l in range(1, L)],              # (1, 4H) each
        "w1h_t": params["w1_t"][:H, :],                             # (H, nh)
        "w1c_t": params["w1_t"][H:, :],                             # (aug, nh)
        "b1": params["b1"],                                         # (1, nh)
        "wmv_t": jnp.concatenate([params["wm_t"], params["wv_t"]], axis=1),  # (nh, 2)
        "bmv": jnp.concatenate([params["bm"], params["bv"]], axis=1),        # (1, 2)
    }


def init_params(key, num_in, num_augment, num_hidden, hidden_lstm, n_layers):
    """Deterministic synthetic init mirroring the PyTorch parameter shapes."""
    params = {"lstm": []}
    kk = 1.0 / jnp.sqrt(jnp.float32(hidden_lstm))
    keys = jax.random.split(key, 4 * n_layers + 6)
    idx = 0
    in_dim = num_in
    for _ in range(n_layers):
        wih = jax.random.uniform(keys[idx], (4 * hidden_lstm, in_dim), minval=-kk, maxval=kk); idx += 1
        whh = jax.random.uniform(keys[idx], (4 * hidden_lstm, hidden_lstm), minval=-kk, maxval=kk); idx += 1
        bih = jax.random.uniform(keys[idx], (4 * hidden_lstm,), minval=-kk, maxval=kk); idx += 1
        bhh = jax.random.uniform(keys[idx], (4 * hidden_lstm,), minval=-kk, maxval=kk); idx += 1
        params["lstm"].append({
            "wih_t": wih.T.astype(jnp.float32),                     # (in_dim, 4H)
            "whh_t": whh.T.astype(jnp.float32),                     # (H, 4H)
            "b": (bih + bhh).reshape(1, -1).astype(jnp.float32),    # (1, 4H)
        })
        in_dim = hidden_lstm

    d_in = hidden_lstm + num_augment
    k1 = 1.0 / jnp.sqrt(jnp.float32(d_in))
    k2 = 1.0 / jnp.sqrt(jnp.float32(num_hidden))
    w1 = jax.random.uniform(keys[idx], (num_hidden, d_in), minval=-k1, maxval=k1); idx += 1
    b1 = jax.random.uniform(keys[idx], (num_hidden,), minval=-k1, maxval=k1); idx += 1
    wm = jax.random.uniform(keys[idx], (1, num_hidden), minval=-k2, maxval=k2); idx += 1
    bm = jax.random.uniform(keys[idx], (1,), minval=-k2, maxval=k2); idx += 1
    wv = jax.random.uniform(keys[idx], (1, num_hidden), minval=-k2, maxval=k2); idx += 1
    bv = jax.random.uniform(keys[idx], (1,), minval=-k2, maxval=k2); idx += 1
    params.update({
        "w1_t": w1.T.astype(jnp.float32),                           # (d_in, num_hidden)
        "b1": b1.reshape(1, -1).astype(jnp.float32),                # (1, num_hidden)
        "wm_t": wm.T.astype(jnp.float32),                           # (num_hidden, 1)
        "bm": bm.reshape(1, 1).astype(jnp.float32),                 # (1, 1)
        "wv_t": wv.T.astype(jnp.float32),                           # (num_hidden, 1)
        "bv": bv.reshape(1, 1).astype(jnp.float32),                 # (1, 1)
    })
    return params


# ------------------------------ pure-JAX reference -----------------------------

def _reference_forward(params, x, c):
    """Plain-JAX mirror of the PyTorch forward (full batch LSTM, then x[:, -1])."""
    seq, batch, _ = x.shape
    y = x
    for lw in params["lstm"]:
        wih_t, whh_t, b = lw["wih_t"], lw["whh_t"], lw["b"]
        H = whh_t.shape[0]
        h = jnp.zeros((batch, H), jnp.float32)
        cst = jnp.zeros((batch, H), jnp.float32)
        outs = []
        for t in range(seq):
            gates = y[t] @ wih_t + h @ whh_t + b
            i = jax.nn.sigmoid(gates[:, :H])
            f = jax.nn.sigmoid(gates[:, H:2 * H])
            g = jnp.tanh(gates[:, 2 * H:3 * H])
            o = jax.nn.sigmoid(gates[:, 3 * H:])
            cst = f * cst + i * g
            h = o * jnp.tanh(cst)
            outs.append(h)
        y = jnp.stack(outs, axis=0)
    last = y[:, -1, :]
    feat = jnp.concatenate([last, c], axis=1)
    hdn = jnp.maximum(feat @ params["w1_t"] + params["b1"], 0.0)
    mean = jnp.tanh(hdn @ params["wm_t"] + params["bm"])
    var = jax.nn.softplus(hdn @ params["wv_t"] + params["bv"]) + 1e-5
    return mean, var


if __name__ == "__main__":
    SEQ_LEN = 8
    BATCH = 2
    NUM_IN = 1
    NUM_AUGMENT = 3
    NUM_HIDDEN = 32
    HIDDEN_LSTM = 32      # num_hidden_lstm == -1 -> same as num_hidden
    N_LAYERS = 2

    key = jax.random.PRNGKey(0)
    kp, kx, kc = jax.random.split(key, 3)
    params = init_params(kp, NUM_IN, NUM_AUGMENT, NUM_HIDDEN, HIDDEN_LSTM, N_LAYERS)
    kparams = prepare_params(params)          # one-time, outside the traced forward

    x = jax.random.normal(kx, (SEQ_LEN, BATCH, NUM_IN), dtype=jnp.float32)
    c = jax.random.normal(kc, (SEQ_LEN, NUM_AUGMENT), dtype=jnp.float32)

    mean_state, var_state = jax.jit(uncertain_lstm_forward)(kparams, x, c)
    jax.block_until_ready((mean_state, var_state))

    ref_mean, ref_var = jax.jit(_reference_forward)(params, x, c)
    jax.block_until_ready((ref_mean, ref_var))

    assert mean_state.shape == (SEQ_LEN, 1)
    assert var_state.shape == (SEQ_LEN, 1)
    assert bool(jnp.all(var_state > 0.0))
    assert bool(jnp.allclose(mean_state, ref_mean, rtol=5e-3, atol=5e-3))
    assert bool(jnp.allclose(var_state, ref_var, rtol=5e-3, atol=5e-3))
    print("KERNEL_OK")
</pallas_src>

<mosaic_0001>
module attributes {stable_mosaic.version = 11 : i64} {
  func.func @_fused_kernel(%arg0: i32, %arg1: memref<8x1xf32, #tpu.memory_space<vmem>>, %arg2: memref<8x3xf32, #tpu.memory_space<vmem>>, %arg3: memref<1x128xf32, #tpu.memory_space<vmem>>, %arg4: memref<1x128xf32, #tpu.memory_space<vmem>>, %arg5: memref<64x256xf32, #tpu.memory_space<vmem>>, %arg6: memref<1x128xf32, #tpu.memory_space<vmem>>, %arg7: memref<32x32xf32, #tpu.memory_space<vmem>>, %arg8: memref<3x32xf32, #tpu.memory_space<vmem>>, %arg9: memref<1x32xf32, #tpu.memory_space<vmem>>, %arg10: memref<32x2xf32, #tpu.memory_space<vmem>>, %arg11: memref<1x2xf32, #tpu.memory_space<vmem>>, %arg12: memref<8x2xf32, #tpu.memory_space<vmem>>, %arg13: memref<8x32xf32, #tpu.memory_space<vmem>>) attributes {dimension_semantics = [#tpu.dimension_semantics<arbitrary>], iteration_bounds = array<i64: 1>, scalar_prefetch = 0 : i64, scratch_operands = 1 : i64, tpu.core_type = #tpu.core_type<tc>, window_params = [{pipeline_mode = #tpu.pipeline_mode<synchronous>, transform_indices = @transform_0, window_bounds = array<i64: 8, 1>}, {pipeline_mode = #tpu.pipeline_mode<synchronous>, transform_indices = @transform_1, window_bounds = array<i64: 8, 3>}, {pipeline_mode = #tpu.pipeline_mode<synchronous>, transform_indices = @transform_2, window_bounds = array<i64: 1, 128>}, {pipeline_mode = #tpu.pipeline_mode<synchronous>, transform_indices = @transform_3, window_bounds = array<i64: 1, 128>}, {pipeline_mode = #tpu.pipeline_mode<synchronous>, transform_indices = @transform_4, window_bounds = array<i64: 64, 256>}, {pipeline_mode = #tpu.pipeline_mode<synchronous>, transform_indices = @transform_5, window_bounds = array<i64: 1, 128>}, {pipeline_mode = #tpu.pipeline_mode<synchronous>, transform_indices = @transform_6, window_bounds = array<i64: 32, 32>}, {pipeline_mode = #tpu.pipeline_mode<synchronous>, transform_indices = @transform_7, window_bounds = array<i64: 3, 32>}, {pipeline_mode = #tpu.pipeline_mode<synchronous>, transform_indices = @transform_8, window_bounds = array<i64: 1, 32>}, {pipeline_mode = #tpu.pipeline_mode<synchronous>, transform_indices = @transform_9, window_bounds = array<i64: 32, 2>}, {pipeline_mode = #tpu.pipeline_mode<synchronous>, transform_indices = @transform_10, window_bounds = array<i64: 1, 2>}, {pipeline_mode = #tpu.pipeline_mode<synchronous>, transform_indices = @transform_11, window_bounds = array<i64: 8, 2>}]} {
    %c0 = arith.constant 0 : index
    %c0_0 = arith.constant 0 : index
    %0 = vector.load %arg1[%c0, %c0_0] : memref<8x1xf32, #tpu.memory_space<vmem>>, vector<8x1xf32>
    %c0_1 = arith.constant 0 : index
    %c0_2 = arith.constant 0 : index
    %1 = vector.load %arg3[%c0_1, %c0_2] : memref<1x128xf32, #tpu.memory_space<vmem>>, vector<1x128xf32>
    %2 = vector.broadcast %0 : vector<8x1xf32> to vector<8x128xf32>
    %3 = vector.broadcast %1 : vector<1x128xf32> to vector<8x128xf32>
    %4 = arith.mulf %2, %3 : vector<8x128xf32>
    %c0_3 = arith.constant 0 : index
    %c0_4 = arith.constant 0 : index
    %5 = vector.load %arg4[%c0_3, %c0_4] : memref<1x128xf32, #tpu.memory_space<vmem>>, vector<1x128xf32>
    %6 = vector.broadcast %5 : vector<1x128xf32> to vector<8x128xf32>
    %7 = arith.addf %4, %6 : vector<8x128xf32>
    %c0_5 = arith.constant 0 : index
    %c0_6 = arith.constant 0 : index
    %8 = vector.load %arg5[%c0_5, %c0_6] : memref<64x256xf32, #tpu.memory_space<vmem>>, vector<64x256xf32>
    %c0_7 = arith.constant 0 : index
    %c0_8 = arith.constant 0 : index
    %9 = vector.load %arg6[%c0_7, %c0_8] : memref<1x128xf32, #tpu.memory_space<vmem>>, vector<1x128xf32>
    %cst = arith.constant 0.000000e+00 : f32
    %10 = vector.broadcast %cst : f32 to vector<1x32xf32>
    %cst_9 = arith.constant 0.000000e+00 : f32
    %11 = vector.broadcast %cst_9 : f32 to vector<1x32xf32>
    %cst_10 = arith.constant 0.000000e+00 : f32
    %12 = vector.broadcast %cst_10 : f32 to vector<1x32xf32>
    %cst_11 = arith.constant 0.000000e+00 : f32
    %13 = vector.broadcast %cst_11 : f32 to vector<1x32xf32>
    %14 = tpu.concatenate %10, %11 in 1 : vector<1x32xf32>, vector<1x32xf32> -> vector<1x64xf32>
    %cst_12 = arith.constant dense<0.000000e+00> : vector<1x256xf32>
    %15 = tpu.matmul %14, %8, %cst_12 {dimension_numbers = #tpu.dot_dimension_numbers<[1], [0], [0], [1], [0, 0, 1, 1], [], []>} : vector<1x64xf32>, vector<64x256xf32>, vector<1x256xf32> -> vector<1x256xf32>
    %16 = vector.extract_strided_slice %7 {offsets = [0, 0], sizes = [1, 128], strides = [1, 1]} : vector<8x128xf32> to vector<1x128xf32>
    %17 = vector.extract_strided_slice %15 {offsets = [0, 0], sizes = [1, 128], strides = [1, 1]} : vector<1x256xf32> to vector<1x128xf32>
    %18 = arith.addf %16, %17 : vector<1x128xf32>
    %19 = arith.negf %18 : vector<1x128xf32>
    %20 = math.exp %19 : vector<1x128xf32>
    %cst_13 = arith.constant 1.000000e+00 : f32
    %21 = vector.broadcast %cst_13 : f32 to vector<1x128xf32>
    %22 = arith.addf %21, %20 : vector<1x128xf32>
    %23 = arith.divf %21, %22 : vector<1x128xf32>
    %24 = math.tanh %18 : vector<1x128xf32>
    %25 = vector.extract_strided_slice %23 {offsets = [0, 0], sizes = [1, 32], strides = [1, 1]} : vector<1x128xf32> to vector<1x32xf32>
    %26 = vector.extract_strided_slice %23 {offsets = [0, 32], sizes = [1, 32], strides = [1, 1]} : vector<1x128xf32> to vector<1x32xf32>
    %27 = vector.extract_strided_slice %23 {offsets = [0, 96], sizes = [1, 32], strides = [1, 1]} : vector<1x128xf32> to vector<1x32xf32>
    %28 = vector.extract_strided_slice %24 {offsets = [0, 64], sizes = [1, 32], strides = [1, 1]} : vector<1x128xf32> to vector<1x32xf32>
    %29 = arith.mulf %26, %12 : vector<1x32xf32>
    %30 = arith.mulf %25, %28 : vector<1x32xf32>
    %31 = arith.addf %29, %30 : vector<1x32xf32>
    %32 = math.tanh %31 : vector<1x32xf32>
    %33 = arith.mulf %27, %32 : vector<1x32xf32>
    %34 = tpu.concatenate %33, %11 in 1 : vector<1x32xf32>, vector<1x32xf32> -> vector<1x64xf32>
    %cst_14 = arith.constant dense<0.000000e+00> : vector<1x256xf32>
    %35 = tpu.matmul %34, %8, %cst_14 {dimension_numbers = #tpu.dot_dimension_numbers<[1], [0], [0], [1], [0, 0, 1, 1], [], []>} : vector<1x64xf32>, vector<64x256xf32>, vector<1x256xf32> -> vector<1x256xf32>
    %36 = vector.extract_strided_slice %7 {offsets = [1, 0], sizes = [1, 128], strides = [1, 1]} : vector<8x128xf32> to vector<1x128xf32>
    %37 = vector.extract_strided_slice %35 {offsets = [0, 0], sizes = [1, 128], strides = [1, 1]} : vector<1x256xf32> to vector<1x128xf32>
    %38 = arith.addf %36, %37 : vector<1x128xf32>
    %39 = arith.negf %38 : vector<1x128xf32>
    %40 = math.exp %39 : vector<1x128xf32>
    %cst_15 = arith.constant 1.000000e+00 : f32
    %41 = vector.broadcast %cst_15 : f32 to vector<1x128xf32>
    %42 = arith.addf %41, %40 : vector<1x128xf32>
    %43 = arith.divf %41, %42 : vector<1x128xf32>
    %44 = math.tanh %38 : vector<1x128xf32>
    %45 = vector.extract_strided_slice %43 {offsets = [0, 0], sizes = [1, 32], strides = [1, 1]} : vector<1x128xf32> to vector<1x32xf32>
    %46 = vector.extract_strided_slice %43 {offsets = [0, 32], sizes = [1, 32], strides = [1, 1]} : vector<1x128xf32> to vector<1x32xf32>
    %47 = vector.extract_strided_slice %43 {offsets = [0, 96], sizes = [1, 32], strides = [1, 1]} : vector<1x128xf32> to vector<1x32xf32>
    %48 = vector.extract_strided_slice %44 {offsets = [0, 64], sizes = [1, 32], strides = [1, 1]} : vector<1x128xf32> to vector<1x32xf32>
    %49 = arith.mulf %46, %31 : vector<1x32xf32>
    %50 = arith.mulf %45, %48 : vector<1x32xf32>
    %51 = arith.addf %49, %50 : vector<1x32xf32>
    %52 = math.tanh %51 : vector<1x32xf32>
    %53 = arith.mulf %47, %52 : vector<1x32xf32>
    %54 = vector.extract_strided_slice %35 {offsets = [0, 128], sizes = [1, 128], strides = [1, 1]} : vector<1x256xf32> to vector<1x128xf32>
    %55 = arith.addf %54, %9 : vector<1x128xf32>
    %56 = arith.negf %55 : vector<1x128xf32>
    %57 = math.exp %56 : vector<1x128xf32>
    %cst_16 = arith.constant 1.000000e+00 : f32
    %58 = vector.broadcast %cst_16 : f32 to vector<1x128xf32>
    %59 = arith.addf %58, %57 : vector<1x128xf32>
    %60 = arith.divf %58, %59 : vector<1x128xf32>
    %61 = math.tanh %55 : vector<1x128xf32>
    %62 = vector.extract_strided_slice %60 {offsets = [0, 0], sizes = [1, 32], strides = [1, 1]} : vector<1x128xf32> to vector<1x32xf32>
    %63 = vector.extract_strided_slice %60 {offsets = [0, 32], sizes = [1, 32], strides = [1, 1]} : vector<1x128xf32> to vector<1x32xf32>
    %64 = vector.extract_strided_slice %60 {offsets = [0, 96], sizes = [1, 32], strides = [1, 1]} : vector<1x128xf32> to vector<1x32xf32>
    %65 = vector.extract_strided_slice %61 {offsets = [0, 64], sizes = [1, 32], strides = [1, 1]} : vector<1x128xf32> to vector<1x32xf32>
    %66 = arith.mulf %63, %13 : vector<1x32xf32>
    %67 = arith.mulf %62, %65 : vector<1x32xf32>
    %68 = arith.addf %66, %67 : vector<1x32xf32>
    %69 = math.tanh %68 : vector<1x32xf32>
    %70 = arith.mulf %64, %69 : vector<1x32xf32>
    %c0_17 = arith.constant 0 : index
    %c0_18 = arith.constant 0 : index
    %71 = vector.load %arg13[%c0_17, %c0_18] : memref<8x32xf32, #tpu.memory_space<vmem>>, vector<1x32xf32>
    tpu.vector_store %arg13[%c0_17, %c0_18], %70 {strides = array<i32>} : memref<8x32xf32, #tpu.memory_space<vmem>>, vector<1x32xf32>,
    %72 = tpu.concatenate %53, %70 in 1 : vector<1x32xf32>, vector<1x32xf32> -> vector<1x64xf32>
    %cst_19 = arith.constant dense<0.000000e+00> : vector<1x256xf32>
    %73 = tpu.matmul %72, %8, %cst_19 {dimension_numbers = #tpu.dot_dimension_numbers<[1], [0], [0], [1], [0, 0, 1, 1], [], []>} : vector<1x64xf32>, vector<64x256xf32>, vector<1x256xf32> -> vector<1x256xf32>
    %74 = vector.extract_strided_slice %7 {offsets = [2, 0], sizes = [1, 128], strides = [1, 1]} : vector<8x128xf32> to vector<1x128xf32>
    %75 = vector.extract_strided_slice %73 {offsets = [0, 0], sizes = [1, 128], strides = [1, 1]} : vector<1x256xf32> to vector<1x128xf32>
    %76 = arith.addf %74, %75 : vector<1x128xf32>
    %77 = arith.negf %76 : vector<1x128xf32>
    %78 = math.exp %77 : vector<1x128xf32>
    %cst_20 = arith.constant 1.000000e+00 : f32
    %79 = vector.broadcast %cst_20 : f32 to vector<1x128xf32>
    %80 = arith.addf %79, %78 : vector<1x128xf32>
    %81 = arith.divf %79, %80 : vector<1x128xf32>
    %82 = math.tanh %76 : vector<1x128xf32>
    %83 = vector.extract_strided_slice %81 {offsets = [0, 0], sizes = [1, 32], strides = [1, 1]} : vector<1x128xf32> to vector<1x32xf32>
    %84 = vector.extract_strided_slice %81 {offsets = [0, 32], sizes = [1, 32], strides = [1, 1]} : vector<1x128xf32> to vector<1x32xf32>
    %85 = vector.extract_strided_slice %81 {offsets = [0, 96], sizes = [1, 32], strides = [1, 1]} : vector<1x128xf32> to vector<1x32xf32>
    %86 = vector.extract_strided_slice %82 {offsets = [0, 64], sizes = [1, 32], strides = [1, 1]} : vector<1x128xf32> to vector<1x32xf32>
    %87 = arith.mulf %84, %51 : vector<1x32xf32>
    %88 = arith.mulf %83, %86 : vector<1x32xf32>
    %89 = arith.addf %87, %88 : vector<1x32xf32>
    %90 = math.tanh %89 : vector<1x32xf32>
    %91 = arith.mulf %85, %90 : vector<1x32xf32>
    %92 = vector.extract_strided_slice %73 {offsets = [0, 128], sizes = [1, 128], strides = [1, 1]} : vector<1x256xf32> to vector<1x128xf32>
    %93 = arith.addf %92, %9 : vector<1x128xf32>
    %94 = arith.negf %93 : vector<1x128xf32>
    %95 = math.exp %94 : vector<1x128xf32>
    %cst_21 = arith.constant 1.000000e+00 : f32
    %96 = vector.broadcast %cst_21 : f32 to vector<1x128xf32>
    %97 = arith.addf %96, %95 : vector<1x128xf32>
    %98 = arith.divf %96, %97 : vector<1x128xf32>
    %99 = math.tanh %93 : vector<1x128xf32>
    %100 = vector.extract_strided_slice %98 {offsets = [0, 0], sizes = [1, 32], strides = [1, 1]} : vector<1x128xf32> to vector<1x32xf32>
    %101 = vector.extract_strided_slice %98 {offsets = [0, 32], sizes = [1, 32], strides = [1, 1]} : vector<1x128xf32> to vector<1x32xf32>
    %102 = vector.extract_strided_slice %98 {offsets = [0, 96], sizes = [1, 32], strides = [1, 1]} : vector<1x128xf32> to vector<1x32xf32>
    %103 = vector.extract_strided_slice %99 {offsets = [0, 64], sizes = [1, 32], strides = [1, 1]} : vector<1x128xf32> to vector<1x32xf32>
    %104 = arith.mulf %101, %68 : vector<1x32xf32>
    %105 = arith.mulf %100, %103 : vector<1x32xf32>
    %106 = arith.addf %104, %105 : vector<1x32xf32>
    %107 = math.tanh %106 : vector<1x32xf32>
    %108 = arith.mulf %102, %107 : vector<1x32xf32>
    %c1 = arith.constant 1 : index
    %c0_22 = arith.constant 0 : index
    %109 = vector.load %arg13[%c1, %c0_22] : memref<8x32xf32, #tpu.memory_space<vmem>>, vector<1x32xf32>
    tpu.vector_store %arg13[%c1, %c0_22], %108 {strides = array<i32>} : memref<8x32xf32, #tpu.memory_space<vmem>>, vector<1x32xf32>,
    %110 = tpu.concatenate %91, %108 in 1 : vector<1x32xf32>, vector<1x32xf32> -> vector<1x64xf32>
    %cst_23 = arith.constant dense<0.000000e+00> : vector<1x256xf32>
    %111 = tpu.matmul %110, %8, %cst_23 {dimension_numbers = #tpu.dot_dimension_numbers<[1], [0], [0], [1], [0, 0, 1, 1], [], []>} : vector<1x64xf32>, vector<64x256xf32>, vector<1x256xf32> -> vector<1x256xf32>
    %112 = vector.extract_strided_slice %7 {offsets = [3, 0], sizes = [1, 128], strides = [1, 1]} : vector<8x128xf32> to vector<1x128xf32>
    %113 = vector.extract_strided_slice %111 {offsets = [0, 0], sizes = [1, 128], strides = [1, 1]} : vector<1x256xf32> to vector<1x128xf32>
    %114 = arith.addf %112, %113 : vector<1x128xf32>
    %115 = arith.negf %114 : vector<1x128xf32>
    %116 = math.exp %115 : vector<1x128xf32>
    %cst_24 = arith.constant 1.000000e+00 : f32
    %117 = vector.broadcast %cst_24 : f32 to vector<1x128xf32>
    %118 = arith.addf %117, %116 : vector<1x128xf32>
    %119 = arith.divf %117, %118 : vector<1x128xf32>
    %120 = math.tanh %114 : vector<1x128xf32>
    %121 = vector.extract_strided_slice %119 {offsets = [0, 0], sizes = [1, 32], strides = [1, 1]} : vector<1x128xf32> to vector<1x32xf32>
    %122 = vector.extract_strided_slice %119 {offsets = [0, 32], sizes = [1, 32], strides = [1, 1]} : vector<1x128xf32> to vector<1x32xf32>
    %123 = vector.extract_strided_slice %119 {offsets = [0, 96], sizes = [1, 32], strides = [1, 1]} : vector<1x128xf32> to vector<1x32xf32>
    %124 = vector.extract_strided_slice %120 {offsets = [0, 64], sizes = [1, 32], strides = [1, 1]} : vector<1x128xf32> to vector<1x32xf32>
    %125 = arith.mulf %122, %89 : vector<1x32xf32>
    %126 = arith.mulf %121, %124 : vector<1x32xf32>
    %127 = arith.addf %125, %126 : vector<1x32xf32>
    %128 = math.tanh %127 : vector<1x32xf32>
    %129 = arith.mulf %123, %128 : vector<1x32xf32>
    %130 = vector.extract_strided_slice %111 {offsets = [0, 128], sizes = [1, 128], strides = [1, 1]} : vector<1x256xf32> to vector<1x128xf32>
    %131 = arith.addf %130, %9 : vector<1x128xf32>
    %132 = arith.negf %131 : vector<1x128xf32>
    %133 = math.exp %132 : vector<1x128xf32>
    %cst_25 = arith.constant 1.000000e+00 : f32
    %134 = vector.broadcast %cst_25 : f32 to vector<1x128xf32>
    %135 = arith.addf %134, %133 : vector<1x128xf32>
    %136 = arith.divf %134, %135 : vector<1x128xf32>
    %137 = math.tanh %131 : vector<1x128xf32>
    %138 = vector.extract_strided_slice %136 {offsets = [0, 0], sizes = [1, 32], strides = [1, 1]} : vector<1x128xf32> to vector<1x32xf32>
    %139 = vector.extract_strided_slice %136 {offsets = [0, 32], sizes = [1, 32], strides = [1, 1]} : vector<1x128xf32> to vector<1x32xf32>
    %140 = vector.extract_strided_slice %136 {offsets = [0, 96], sizes = [1, 32], strides = [1, 1]} : vector<1x128xf32> to vector<1x32xf32>
    %141 = vector.extract_strided_slice %137 {offsets = [0, 64], sizes = [1, 32], strides = [1, 1]} : vector<1x128xf32> to vector<1x32xf32>
    %142 = arith.mulf %139, %106 : vector<1x32xf32>
    %143 = arith.mulf %138, %141 : vector<1x32xf32>
    %144 = arith.addf %142, %143 : vector<1x32xf32>
    %145 = math.tanh %144 : vector<1x32xf32>
    %146 = arith.mulf %140, %145 : vector<1x32xf32>
    %c2 = arith.constant 2 : index
    %c0_26 = arith.constant 0 : index
    %147 = vector.load %arg13[%c2, %c0_26] : memref<8x32xf32, #tpu.memory_space<vmem>>, vector<1x32xf32>
    tpu.vector_store %arg13[%c2, %c0_26], %146 {strides = array<i32>} : memref<8x32xf32, #tpu.memory_space<vmem>>, vector<1x32xf32>,
    %148 = tpu.concatenate %129, %146 in 1 : vector<1x32xf32>, vector<1x32xf32> -> vector<1x64xf32>
    %cst_27 = arith.constant dense<0.000000e+00> : vector<1x256xf32>
    %149 = tpu.matmul %148, %8, %cst_27 {dimension_numbers = #tpu.dot_dimension_numbers<[1], [0], [0], [1], [0, 0, 1, 1], [], []>} : vector<1x64xf32>, vector<64x256xf32>, vector<1x256xf32> -> vector<1x256xf32>
    %150 = vector.extract_strided_slice %7 {offsets = [4, 0], sizes = [1, 128], strides = [1, 1]} : vector<8x128xf32> to vector<1x128xf32>
    %151 = vector.extract_strided_slice %149 {offsets = [0, 0], sizes = [1, 128], strides = [1, 1]} : vector<1x256xf32> to vector<1x128xf32>
    %152 = arith.addf %150, %151 : vector<1x128xf32>
    %153 = arith.negf %152 : vector<1x128xf32>
    %154 = math.exp %153 : vector<1x128xf32>
    %cst_28 = arith.constant 1.000000e+00 : f32
    %155 = vector.broadcast %cst_28 : f32 to vector<1x128xf32>
    %156 = arith.addf %155, %154 : vector<1x128xf32>
    %157 = arith.divf %155, %156 : vector<1x128xf32>
    %158 = math.tanh %152 : vector<1x128xf32>
    %159 = vector.extract_strided_slice %157 {offsets = [0, 0], sizes = [1, 32], strides = [1, 1]} : vector<1x128xf32> to vector<1x32xf32>
    %160 = vector.extract_strided_slice %157 {offsets = [0, 32], sizes = [1, 32], strides = [1, 1]} : vector<1x128xf32> to vector<1x32xf32>
    %161 = vector.extract_strided_slice %157 {offsets = [0, 96], sizes = [1, 32], strides = [1, 1]} : vector<1x128xf32> to vector<1x32xf32>
    %162 = vector.extract_strided_slice %158 {offsets = [0, 64], sizes = [1, 32], strides = [1, 1]} : vector<1x128xf32> to vector<1x32xf32>
    %163 = arith.mulf %160, %127 : vector<1x32xf32>
    %164 = arith.mulf %159, %162 : vector<1x32xf32>
    %165 = arith.addf %163, %164 : vector<1x32xf32>
    %166 = math.tanh %165 : vector<1x32xf32>
    %167 = arith.mulf %161, %166 : vector<1x32xf32>
    %168 = vector.extract_strided_slice %149 {offsets = [0, 128], sizes = [1, 128], strides = [1, 1]} : vector<1x256xf32> to vector<1x128xf32>
    %169 = arith.addf %168, %9 : vector<1x128xf32>
    %170 = arith.negf %169 : vector<1x128xf32>
    %171 = math.exp %170 : vector<1x128xf32>
    %cst_29 = arith.constant 1.000000e+00 : f32
    %172 = vector.broadcast %cst_29 : f32 to vector<1x128xf32>
    %173 = arith.addf %172, %171 : vector<1x128xf32>
    %174 = arith.divf %172, %173 : vector<1x128xf32>
    %175 = math.tanh %169 : vector<1x128xf32>
    %176 = vector.extract_strided_slice %174 {offsets = [0, 0], sizes = [1, 32], strides = [1, 1]} : vector<1x128xf32> to vector<1x32xf32>
    %177 = vector.extract_strided_slice %174 {offsets = [0, 32], sizes = [1, 32], strides = [1, 1]} : vector<1x128xf32> to vector<1x32xf32>
    %178 = vector.extract_strided_slice %174 {offsets = [0, 96], sizes = [1, 32], strides = [1, 1]} : vector<1x128xf32> to vector<1x32xf32>
    %179 = vector.extract_strided_slice %175 {offsets = [0, 64], sizes = [1, 32], strides = [1, 1]} : vector<1x128xf32> to vector<1x32xf32>
    %180 = arith.mulf %177, %144 : vector<1x32xf32>
    %181 = arith.mulf %176, %179 : vector<1x32xf32>
    %182 = arith.addf %180, %181 : vector<1x32xf32>
    %183 = math.tanh %182 : vector<1x32xf32>
    %184 = arith.mulf %178, %183 : vector<1x32xf32>
    %c3 = arith.constant 3 : index
    %c0_30 = arith.constant 0 : index
    %185 = vector.load %arg13[%c3, %c0_30] : memref<8x32xf32, #tpu.memory_space<vmem>>, vector<1x32xf32>
    tpu.vector_store %arg13[%c3, %c0_30], %184 {strides = array<i32>} : memref<8x32xf32, #tpu.memory_space<vmem>>, vector<1x32xf32>,
    %186 = tpu.concatenate %167, %184 in 1 : vector<1x32xf32>, vector<1x32xf32> -> vector<1x64xf32>
    %cst_31 = arith.constant dense<0.000000e+00> : vector<1x256xf32>
    %187 = tpu.matmul %186, %8, %cst_31 {dimension_numbers = #tpu.dot_dimension_numbers<[1], [0], [0], [1], [0, 0, 1, 1], [], []>} : vector<1x64xf32>, vector<64x256xf32>, vector<1x256xf32> -> vector<1x256xf32>
    %188 = vector.extract_strided_slice %7 {offsets = [5, 0], sizes = [1, 128], strides = [1, 1]} : vector<8x128xf32> to vector<1x128xf32>
    %189 = vector.extract_strided_slice %187 {offsets = [0, 0], sizes = [1, 128], strides = [1, 1]} : vector<1x256xf32> to vector<1x128xf32>
    %190 = arith.addf %188, %189 : vector<1x128xf32>
    %191 = arith.negf %190 : vector<1x128xf32>
    %192 = math.exp %191 : vector<1x128xf32>
    %cst_32 = arith.constant 1.000000e+00 : f32
    %193 = vector.broadcast %cst_32 : f32 to vector<1x128xf32>
    %194 = arith.addf %193, %192 : vector<1x128xf32>
    %195 = arith.divf %193, %194 : vector<1x128xf32>
    %196 = math.tanh %190 : vector<1x128xf32>
    %197 = vector.extract_strided_slice %195 {offsets = [0, 0], sizes = [1, 32], strides = [1, 1]} : vector<1x128xf32> to vector<1x32xf32>
    %198 = vector.extract_strided_slice %195 {offsets = [0, 32], sizes = [1, 32], strides = [1, 1]} : vector<1x128xf32> to vector<1x32xf32>
    %199 = vector.extract_strided_slice %195 {offsets = [0, 96], sizes = [1, 32], strides = [1, 1]} : vector<1x128xf32> to vector<1x32xf32>
    %200 = vector.extract_strided_slice %196 {offsets = [0, 64], sizes = [1, 32], strides = [1, 1]} : vector<1x128xf32> to vector<1x32xf32>
    %201 = arith.mulf %198, %165 : vector<1x32xf32>
    %202 = arith.mulf %197, %200 : vector<1x32xf32>
    %203 = arith.addf %201, %202 : vector<1x32xf32>
    %204 = math.tanh %203 : vector<1x32xf32>
    %205 = arith.mulf %199, %204 : vector<1x32xf32>
    %206 = vector.extract_strided_slice %187 {offsets = [0, 128], sizes = [1, 128], strides = [1, 1]} : vector<1x256xf32> to vector<1x128xf32>
    %207 = arith.addf %206, %9 : vector<1x128xf32>
    %208 = arith.negf %207 : vector<1x128xf32>
    %209 = math.exp %208 : vector<1x128xf32>
    %cst_33 = arith.constant 1.000000e+00 : f32
    %210 = vector.broadcast %cst_33 : f32 to vector<1x128xf32>
    %211 = arith.addf %210, %209 : vector<1x128xf32>
    %212 = arith.divf %210, %211 : vector<1x128xf32>
    %213 = math.tanh %207 : vector<1x128xf32>
    %214 = vector.extract_strided_slice %212 {offsets = [0, 0], sizes = [1, 32], strides = [1, 1]} : vector<1x128xf32> to vector<1x32xf32>
    %215 = vector.extract_strided_slice %212 {offsets = [0, 32], sizes = [1, 32], strides = [1, 1]} : vector<1x128xf32> to vector<1x32xf32>
    %216 = vector.extract_strided_slice %212 {offsets = [0, 96], sizes = [1, 32], strides = [1, 1]} : vector<1x128xf32> to vector<1x32xf32>
    %217 = vector.extract_strided_slice %213 {offsets = [0, 64], sizes = [1, 32], strides = [1, 1]} : vector<1x128xf32> to vector<1x32xf32>
    %218 = arith.mulf %215, %182 : vector<1x32xf32>
    %219 = arith.mulf %214, %217 : vector<1x32xf32>
    %220 = arith.addf %218, %219 : vector<1x32xf32>
    %221 = math.tanh %220 : vector<1x32xf32>
    %222 = arith.mulf %216, %221 : vector<1x32xf32>
    %c4 = arith.constant 4 : index
    %c0_34 = arith.constant 0 : index
    %223 = vector.load %arg13[%c4, %c0_34] : memref<8x32xf32, #tpu.memory_space<vmem>>, vector<1x32xf32>
    tpu.vector_store %arg13[%c4, %c0_34], %222 {strides = array<i32>} : memref<8x32xf32, #tpu.memory_space<vmem>>, vector<1x32xf32>,
    %224 = tpu.concatenate %205, %222 in 1 : vector<1x32xf32>, vector<1x32xf32> -> vector<1x64xf32>
    %cst_35 = arith.constant dense<0.000000e+00> : vector<1x256xf32>
    %225 = tpu.matmul %224, %8, %cst_35 {dimension_numbers = #tpu.dot_dimension_numbers<[1], [0], [0], [1], [0, 0, 1, 1], [], []>} : vector<1x64xf32>, vector<64x256xf32>, vector<1x256xf32> -> vector<1x256xf32>
    %226 = vector.extract_strided_slice %7 {offsets = [6, 0], sizes = [1, 128], strides = [1, 1]} : vector<8x128xf32> to vector<1x128xf32>
    %227 = vector.extract_strided_slice %225 {offsets = [0, 0], sizes = [1, 128], strides = [1, 1]} : vector<1x256xf32> to vector<1x128xf32>
    %228 = arith.addf %226, %227 : vector<1x128xf32>
    %229 = arith.negf %228 : vector<1x128xf32>
    %230 = math.exp %229 : vector<1x128xf32>
    %cst_36 = arith.constant 1.000000e+00 : f32
    %231 = vector.broadcast %cst_36 : f32 to vector<1x128xf32>
    %232 = arith.addf %231, %230 : vector<1x128xf32>
    %233 = arith.divf %231, %232 : vector<1x128xf32>
    %234 = math.tanh %228 : vector<1x128xf32>
    %235 = vector.extract_strided_slice %233 {offsets = [0, 0], sizes = [1, 32], strides = [1, 1]} : vector<1x128xf32> to vector<1x32xf32>
    %236 = vector.extract_strided_slice %233 {offsets = [0, 32], sizes = [1, 32], strides = [1, 1]} : vector<1x128xf32> to vector<1x32xf32>
    %237 = vector.extract_strided_slice %233 {offsets = [0, 96], sizes = [1, 32], strides = [1, 1]} : vector<1x128xf32> to vector<1x32xf32>
    %238 = vector.extract_strided_slice %234 {offsets = [0, 64], sizes = [1, 32], strides = [1, 1]} : vector<1x128xf32> to vector<1x32xf32>
    %239 = arith.mulf %236, %203 : vector<1x32xf32>
    %240 = arith.mulf %235, %238 : vector<1x32xf32>
    %241 = arith.addf %239, %240 : vector<1x32xf32>
    %242 = math.tanh %241 : vector<1x32xf32>
    %243 = arith.mulf %237, %242 : vector<1x32xf32>
    %244 = vector.extract_strided_slice %225 {offsets = [0, 128], sizes = [1, 128], strides = [1, 1]} : vector<1x256xf32> to vector<1x128xf32>
    %245 = arith.addf %244, %9 : vector<1x128xf32>
    %246 = arith.negf %245 : vector<1x128xf32>
    %247 = math.exp %246 : vector<1x128xf32>
    %cst_37 = arith.constant 1.000000e+00 : f32
    %248 = vector.broadcast %cst_37 : f32 to vector<1x128xf32>
    %249 = arith.addf %248, %247 : vector<1x128xf32>
    %250 = arith.divf %248, %249 : vector<1x128xf32>
    %251 = math.tanh %245 : vector<1x128xf32>
    %252 = vector.extract_strided_slice %250 {offsets = [0, 0], sizes = [1, 32], strides = [1, 1]} : vector<1x128xf32> to vector<1x32xf32>
    %253 = vector.extract_strided_slice %250 {offsets = [0, 32], sizes = [1, 32], strides = [1, 1]} : vector<1x128xf32> to vector<1x32xf32>
    %254 = vector.extract_strided_slice %250 {offsets = [0, 96], sizes = [1, 32], strides = [1, 1]} : vector<1x128xf32> to vector<1x32xf32>
    %255 = vector.extract_strided_slice %251 {offsets = [0, 64], sizes = [1, 32], strides = [1, 1]} : vector<1x128xf32> to vector<1x32xf32>
    %256 = arith.mulf %253, %220 : vector<1x32xf32>
    %257 = arith.mulf %252, %255 : vector<1x32xf32>
    %258 = arith.addf %256, %257 : vector<1x32xf32>
    %259 = math.tanh %258 : vector<1x32xf32>
    %260 = arith.mulf %254, %259 : vector<1x32xf32>
    %c5 = arith.constant 5 : index
    %c0_38 = arith.constant 0 : index
    %261 = vector.load %arg13[%c5, %c0_38] : memref<8x32xf32, #tpu.memory_space<vmem>>, vector<1x32xf32>
    tpu.vector_store %arg13[%c5, %c0_38], %260 {strides = array<i32>} : memref<8x32xf32, #tpu.memory_space<vmem>>, vector<1x32xf32>,
    %262 = tpu.concatenate %243, %260 in 1 : vector<1x32xf32>, vector<1x32xf32> -> vector<1x64xf32>
    %cst_39 = arith.constant dense<0.000000e+00> : vector<1x256xf32>
    %263 = tpu.matmul %262, %8, %cst_39 {dimension_numbers = #tpu.dot_dimension_numbers<[1], [0], [0], [1], [0, 0, 1, 1], [], []>} : vector<1x64xf32>, vector<64x256xf32>, vector<1x256xf32> -> vector<1x256xf32>
    %264 = vector.extract_strided_slice %7 {offsets = [7, 0], sizes = [1, 128], strides = [1, 1]} : vector<8x128xf32> to vector<1x128xf32>
    %265 = vector.extract_strided_slice %263 {offsets = [0, 0], sizes = [1, 128], strides = [1, 1]} : vector<1x256xf32> to vector<1x128xf32>
    %266 = arith.addf %264, %265 : vector<1x128xf32>
    %267 = arith.negf %266 : vector<1x128xf32>
    %268 = math.exp %267 : vector<1x128xf32>
    %cst_40 = arith.constant 1.000000e+00 : f32
    %269 = vector.broadcast %cst_40 : f32 to vector<1x128xf32>
    %270 = arith.addf %269, %268 : vector<1x128xf32>
    %271 = arith.divf %269, %270 : vector<1x128xf32>
    %272 = math.tanh %266 : vector<1x128xf32>
    %273 = vector.extract_strided_slice %271 {offsets = [0, 0], sizes = [1, 32], strides = [1, 1]} : vector<1x128xf32> to vector<1x32xf32>
    %274 = vector.extract_strided_slice %271 {offsets = [0, 32], sizes = [1, 32], strides = [1, 1]} : vector<1x128xf32> to vector<1x32xf32>
    %275 = vector.extract_strided_slice %271 {offsets = [0, 96], sizes = [1, 32], strides = [1, 1]} : vector<1x128xf32> to vector<1x32xf32>
    %276 = vector.extract_strided_slice %272 {offsets = [0, 64], sizes = [1, 32], strides = [1, 1]} : vector<1x128xf32> to vector<1x32xf32>
    %277 = arith.mulf %274, %241 : vector<1x32xf32>
    %278 = arith.mulf %273, %276 : vector<1x32xf32>
    %279 = arith.addf %277, %278 : vector<1x32xf32>
    %280 = math.tanh %279 : vector<1x32xf32>
    %281 = arith.mulf %275, %280 : vector<1x32xf32>
    %282 = vector.extract_strided_slice %263 {offsets = [0, 128], sizes = [1, 128], strides = [1, 1]} : vector<1x256xf32> to vector<1x128xf32>
    %283 = arith.addf %282, %9 : vector<1x128xf32>
    %284 = arith.negf %283 : vector<1x128xf32>
    %285 = math.exp %284 : vector<1x128xf32>
    %cst_41 = arith.constant 1.000000e+00 : f32
    %286 = vector.broadcast %cst_41 : f32 to vector<1x128xf32>
    %287 = arith.addf %286, %285 : vector<1x128xf32>
    %288 = arith.divf %286, %287 : vector<1x128xf32>
    %289 = math.tanh %283 : vector<1x128xf32>
    %290 = vector.extract_strided_slice %288 {offsets = [0, 0], sizes = [1, 32], strides = [1, 1]} : vector<1x128xf32> to vector<1x32xf32>
    %291 = vector.extract_strided_slice %288 {offsets = [0, 32], sizes = [1, 32], strides = [1, 1]} : vector<1x128xf32> to vector<1x32xf32>
    %292 = vector.extract_strided_slice %288 {offsets = [0, 96], sizes = [1, 32], strides = [1, 1]} : vector<1x128xf32> to vector<1x32xf32>
    %293 = vector.extract_strided_slice %289 {offsets = [0, 64], sizes = [1, 32], strides = [1, 1]} : vector<1x128xf32> to vector<1x32xf32>
    %294 = arith.mulf %291, %258 : vector<1x32xf32>
    %295 = arith.mulf %290, %293 : vector<1x32xf32>
    %296 = arith.addf %294, %295 : vector<1x32xf32>
    %297 = math.tanh %296 : vector<1x32xf32>
    %298 = arith.mulf %292, %297 : vector<1x32xf32>
    %c6 = arith.constant 6 : index
    %c0_42 = arith.constant 0 : index
    %299 = vector.load %arg13[%c6, %c0_42] : memref<8x32xf32, #tpu.memory_space<vmem>>, vector<1x32xf32>
    tpu.vector_store %arg13[%c6, %c0_42], %298 {strides = array<i32>} : memref<8x32xf32, #tpu.memory_space<vmem>>, vector<1x32xf32>,
    %300 = tpu.concatenate %281, %298 in 1 : vector<1x32xf32>, vector<1x32xf32> -> vector<1x64xf32>
    %cst_43 = arith.constant dense<0.000000e+00> : vector<1x256xf32>
    %301 = tpu.matmul %300, %8, %cst_43 {dimension_numbers = #tpu.dot_dimension_numbers<[1], [0], [0], [1], [0, 0, 1, 1], [], []>} : vector<1x64xf32>, vector<64x256xf32>, vector<1x256xf32> -> vector<1x256xf32>
    %302 = vector.extract_strided_slice %301 {offsets = [0, 128], sizes = [1, 128], strides = [1, 1]} : vector<1x256xf32> to vector<1x128xf32>
    %303 = arith.addf %302, %9 : vector<1x128xf32>
    %304 = arith.negf %303 : vector<1x128xf32>
    %305 = math.exp %304 : vector<1x128xf32>
    %cst_44 = arith.constant 1.000000e+00 : f32
    %306 = vector.broadcast %cst_44 : f32 to vector<1x128xf32>
    %307 = arith.addf %306, %305 : vector<1x128xf32>
    %308 = arith.divf %306, %307 : vector<1x128xf32>
    %309 = math.tanh %303 : vector<1x128xf32>
    %310 = vector.extract_strided_slice %308 {offsets = [0, 0], sizes = [1, 32], strides = [1, 1]} : vector<1x128xf32> to vector<1x32xf32>
    %311 = vector.extract_strided_slice %308 {offsets = [0, 32], sizes = [1, 32], strides = [1, 1]} : vector<1x128xf32> to vector<1x32xf32>
    %312 = vector.extract_strided_slice %308 {offsets = [0, 96], sizes = [1, 32], strides = [1, 1]} : vector<1x128xf32> to vector<1x32xf32>
    %313 = vector.extract_strided_slice %309 {offsets = [0, 64], sizes = [1, 32], strides = [1, 1]} : vector<1x128xf32> to vector<1x32xf32>
    %314 = arith.mulf %311, %296 : vector<1x32xf32>
    %315 = arith.mulf %310, %313 : vector<1x32xf32>
    %316 = arith.addf %314, %315 : vector<1x32xf32>
    %317 = math.tanh %316 : vector<1x32xf32>
    %318 = arith.mulf %312, %317 : vector<1x32xf32>
    %c7 = arith.constant 7 : index
    %c0_45 = arith.constant 0 : index
    %319 = vector.load %arg13[%c7, %c0_45] : memref<8x32xf32, #tpu.memory_space<vmem>>, vector<1x32xf32>
    tpu.vector_store %arg13[%c7, %c0_45], %318 {strides = array<i32>} : memref<8x32xf32, #tpu.memory_space<vmem>>, vector<1x32xf32>,
    %c0_46 = arith.constant 0 : index
    %c0_47 = arith.constant 0 : index
    %320 = vector.load %arg13[%c0_46, %c0_47] : memref<8x32xf32, #tpu.memory_space<vmem>>, vector<8x32xf32>
    %c0_48 = arith.constant 0 : index
    %c0_49 = arith.constant 0 : index
    %321 = vector.load %arg7[%c0_48, %c0_49] : memref<32x32xf32, #tpu.memory_space<vmem>>, vector<32x32xf32>
    %cst_50 = arith.constant dense<0.000000e+00> : vector<8x32xf32>
    %322 = tpu.matmul %320, %321, %cst_50 {dimension_numbers = #tpu.dot_dimension_numbers<[1], [0], [0], [1], [0, 0, 1, 1], [], []>} : vector<8x32xf32>, vector<32x32xf32>, vector<8x32xf32> -> vector<8x32xf32>
    %c0_51 = arith.constant 0 : index
    %c0_52 = arith.constant 0 : index
    %323 = vector.load %arg2[%c0_51, %c0_52] : memref<8x3xf32, #tpu.memory_space<vmem>>, vector<8x3xf32>
    %c0_53 = arith.constant 0 : index
    %c0_54 = arith.constant 0 : index
    %324 = vector.load %arg8[%c0_53, %c0_54] : memref<3x32xf32, #tpu.memory_space<vmem>>, vector<3x32xf32>
    %cst_55 = arith.constant dense<0.000000e+00> : vector<8x32xf32>
    %325 = tpu.matmul %323, %324, %cst_55 {dimension_numbers = #tpu.dot_dimension_numbers<[1], [0], [0], [1], [0, 0, 1, 1], [], []>} : vector<8x3xf32>, vector<3x32xf32>, vector<8x32xf32> -> vector<8x32xf32>
    %326 = arith.addf %322, %325 : vector<8x32xf32>
    %c0_56 = arith.constant 0 : index
    %c0_57 = arith.constant 0 : index
    %327 = vector.load %arg9[%c0_56, %c0_57] : memref<1x32xf32, #tpu.memory_space<vmem>>, vector<1x32xf32>
    %328 = vector.broadcast %327 : vector<1x32xf32> to vector<8x32xf32>
    %329 = arith.addf %326, %328 : vector<8x32xf32>
    %cst_58 = arith.constant 0.000000e+00 : f32
    %330 = vector.broadcast %cst_58 : f32 to vector<8x32xf32>
    %331 = arith.maximumf %329, %330 : vector<8x32xf32>
    %c0_59 = arith.constant 0 : index
    %c0_60 = arith.constant 0 : index
    %332 = vector.load %arg10[%c0_59, %c0_60] : memref<32x2xf32, #tpu.memory_space<vmem>>, vector<32x2xf32>
    %cst_61 = arith.constant dense<0.000000e+00> : vector<8x2xf32>
    %333 = tpu.matmul %331, %332, %cst_61 {dimension_numbers = #tpu.dot_dimension_numbers<[1], [0], [0], [1], [0, 0, 1, 1], [], []>} : vector<8x32xf32>, vector<32x2xf32>, vector<8x2xf32> -> vector<8x2xf32>
    %c0_62 = arith.constant 0 : index
    %c0_63 = arith.constant 0 : index
    %334 = vector.load %arg11[%c0_62, %c0_63] : memref<1x2xf32, #tpu.memory_space<vmem>>, vector<1x2xf32>
    %335 = vector.broadcast %334 : vector<1x2xf32> to vector<8x2xf32>
    %336 = arith.addf %333, %335 : vector<8x2xf32>
    %337 = tpu.iota {dimensions = array<i32: 1>} : vector<8x2xi32>
    %c0_i32 = arith.constant 0 : i32
    %338 = vector.broadcast %c0_i32 : i32 to vector<8x2xi32>
    %339 = arith.cmpi eq, %337, %338 : vector<8x2xi32>
    %340 = math.tanh %336 : vector<8x2xf32>
    %cst_64 = arith.constant 0.000000e+00 : f32
    %341 = vector.broadcast %cst_64 : f32 to vector<8x2xf32>
    %342 = arith.maximumf %336, %341 : vector<8x2xf32>
    %343 = vector.broadcast %cst_64 : f32 to vector<8x2xf32>
    %344 = arith.subf %336, %343 : vector<8x2xf32>
    %345 = arith.cmpf one, %344, %344 : vector<8x2xf32>
    %346 = vector.broadcast %cst_64 : f32 to vector<8x2xf32>
    %347 = arith.addf %336, %346 : vector<8x2xf32>
    %348 = math.absf %344 : vector<8x2xf32>
    %cst_65 = arith.constant 0.000000e+00 : f32
    %349 = vector.broadcast %cst_65 : f32 to vector<8x2xf32>
    %350 = arith.subf %349, %348 : vector<8x2xf32>
    %351 = math.exp %350 : vector<8x2xf32>
    %352 = math.log1p %351 : vector<8x2xf32>
    %353 = arith.addf %342, %352 : vector<8x2xf32>
    %354 = arith.select %345, %347, %353 : vector<8x2xi1>, vector<8x2xf32>
    %cst_66 = arith.constant 9.99999974E-6 : f32
    %355 = vector.broadcast %cst_66 : f32 to vector<8x2xf32>
    %356 = arith.addf %354, %355 : vector<8x2xf32>
    %357 = arith.select %339, %340, %356 : vector<8x2xi1>, vector<8x2xf32>
    %c0_67 = arith.constant 0 : index
    %c0_68 = arith.constant 0 : index
    %358 = vector.load %arg12[%c0_67, %c0_68] : memref<8x2xf32, #tpu.memory_space<vmem>>, vector<8x2xf32>
    tpu.vector_store %arg12[%c0_67, %c0_68], %357 {strides = array<i32>} : memref<8x2xf32, #tpu.memory_space<vmem>>, vector<8x2xf32>,
    return
  }
  func.func @transform_0(%arg0: i32) -> (i32, i32) {
    %c0_i32 = arith.constant 0 : i32
    %c0_i32_0 = arith.constant 0 : i32
    %c0_i32_1 = arith.constant 0 : i32
    return %c0_i32, %c0_i32_0 : i32, i32
  }
  func.func @transform_1(%arg0: i32) -> (i32, i32) {
    %c0_i32 = arith.constant 0 : i32
    %c0_i32_0 = arith.constant 0 : i32
    %c0_i32_1 = arith.constant 0 : i32
    return %c0_i32, %c0_i32_0 : i32, i32
  }
  func.func @transform_2(%arg0: i32) -> (i32, i32) {
    %c0_i32 = arith.constant 0 : i32
    %c0_i32_0 = arith.constant 0 : i32
    %c0_i32_1 = arith.constant 0 : i32
    return %c0_i32, %c0_i32_0 : i32, i32
  }
  func.func @transform_3(%arg0: i32) -> (i32, i32) {
    %c0_i32 = arith.constant 0 : i32
    %c0_i32_0 = arith.constant 0 : i32
    %c0_i32_1 = arith.constant 0 : i32
    return %c0_i32, %c0_i32_0 : i32, i32
  }
  func.func @transform_4(%arg0: i32) -> (i32, i32) {
    %c0_i32 = arith.constant 0 : i32
    %c0_i32_0 = arith.constant 0 : i32
    %c0_i32_1 = arith.constant 0 : i32
    return %c0_i32, %c0_i32_0 : i32, i32
  }
  func.func @transform_5(%arg0: i32) -> (i32, i32) {
    %c0_i32 = arith.constant 0 : i32
    %c0_i32_0 = arith.constant 0 : i32
    %c0_i32_1 = arith.constant 0 : i32
    return %c0_i32, %c0_i32_0 : i32, i32
  }
  func.func @transform_6(%arg0: i32) -> (i32, i32) {
    %c0_i32 = arith.constant 0 : i32
    %c0_i32_0 = arith.constant 0 : i32
    %c0_i32_1 = arith.constant 0 : i32
    return %c0_i32, %c0_i32_0 : i32, i32
  }
  func.func @transform_7(%arg0: i32) -> (i32, i32) {
    %c0_i32 = arith.constant 0 : i32
    %c0_i32_0 = arith.constant 0 : i32
    %c0_i32_1 = arith.constant 0 : i32
    return %c0_i32, %c0_i32_0 : i32, i32
  }
  func.func @transform_8(%arg0: i32) -> (i32, i32) {
    %c0_i32 = arith.constant 0 : i32
    %c0_i32_0 = arith.constant 0 : i32
    %c0_i32_1 = arith.constant 0 : i32
    return %c0_i32, %c0_i32_0 : i32, i32
  }
  func.func @transform_9(%arg0: i32) -> (i32, i32) {
    %c0_i32 = arith.constant 0 : i32
    %c0_i32_0 = arith.constant 0 : i32
    %c0_i32_1 = arith.constant 0 : i32
    return %c0_i32, %c0_i32_0 : i32, i32
  }
  func.func @transform_10(%arg0: i32) -> (i32, i32) {
    %c0_i32 = arith.constant 0 : i32
    %c0_i32_0 = arith.constant 0 : i32
    %c0_i32_1 = arith.constant 0 : i32
    return %c0_i32, %c0_i32_0 : i32, i32
  }
  func.func @transform_11(%arg0: i32) -> (i32, i32) {
    %c0_i32 = arith.constant 0 : i32
    %c0_i32_0 = arith.constant 0 : i32
    %c0_i32_1 = arith.constant 0 : i32
    return %c0_i32, %c0_i32_0 : i32, i32
  }
}

</mosaic_0001>

<llo_original>
// kernel: uncertain_lstm_forward.1
$region0: #{uncertain_lstm_forward.1}
  #allocation0 [shape = 'u32[]', space=smem, size = 0x4, offset = 0x4, fixed_abs, tag = 'smem constant byte address 0x4 - core index']
  #allocation1 [shape = 'u32[144,128]{1,0:T(1,128)}', space=vmem, size = 0x12000, scoped, tag = 'internal scratch']
  #allocation2 [shape = 'f32[8,32]{1,0:T(8,128)}', space=vmem, size = 0x1000, scoped, tag = 'scratch operand']
  %s0 = inlined_call_operand.vmem [shape: f32[8,1], index: 0, kind: input, shape index: {}]
  %s1 = inlined_call_operand.vmem [shape: f32[8,3], index: 1, kind: input, shape index: {}]
  %s2 = inlined_call_operand.vmem [shape: f32[1,128], index: 2, kind: input, shape index: {}]
  %s3 = inlined_call_operand.vmem [shape: f32[1,128], index: 3, kind: input, shape index: {}]
  %s4 = inlined_call_operand.hbm [shape: f32[64,256], index: 4, kind: input, shape index: {}]
  %s5 = inlined_call_operand.vmem [shape: f32[1,128], index: 5, kind: input, shape index: {}]
  %s6 = inlined_call_operand.vmem [shape: f32[32,32], index: 6, kind: input, shape index: {}]
  %s7 = inlined_call_operand.vmem [shape: f32[3,32], index: 7, kind: input, shape index: {}]
  %s8 = inlined_call_operand.vmem [shape: f32[1,32], index: 8, kind: input, shape index: {}]
  %s9 = inlined_call_operand.vmem [shape: f32[32,2], index: 9, kind: input, shape index: {}]
  %s10 = inlined_call_operand.vmem [shape: f32[1,2], index: 10, kind: input, shape index: {}]
  %s11 = inlined_call_operand.vmem [shape: f32[8,2], index: 11, kind: output, shape index: {}]
  %s12 = sld [smem:[#allocation0]]
  $region58: #{uncertain_lstm_forward.1} parent=0
    _
  %s14 = ssub.s32 1, %s12
  %s15 = scalar_select 0, %s14, %s12
  $region1: #{uncertain_lstm_forward.1} parent=0
    #allocation3 [shape = 'u8[65536]{0}', space=vmem, size = 0x10000, scoped, tag = 'input window, operand 4, single buffered']
    #allocation4 [shape = 's32[1]{0}', space=sflag, size = 0x4, scoped, tag = 'scoped memory for uncertain_lstm_forward.1']
    %16 = vsyncpa [#allocation4], 0
    // Predicated region
    $region2: #{uncertain_lstm_forward.1} parent=1 // pred_check
      _
    $region3: #{uncertain_lstm_forward.1} parent=1 // pred_check_branch
      %18 = sbr.rel (0) target = $region5
    $region4: #{uncertain_lstm_forward.1} parent=1 // pred_region
      _
    $region5: #{uncertain_lstm_forward.1} parent=1 // pred_fallthru
      _
    // Predicated region
    $region6: #{uncertain_lstm_forward.1} parent=1 // pred_check
      _
    $region7: #{uncertain_lstm_forward.1} parent=1 // pred_check_branch
      %20 = sbr.rel (0) target = $region9
    $region8: #{uncertain_lstm_forward.1} parent=1 // pred_region
      _
    $region9: #{uncertain_lstm_forward.1} parent=1 // pred_fallthru
      _
    // Predicated region
    $region10: #{uncertain_lstm_forward.1} parent=1 // pred_check
      _
    $region11: #{uncertain_lstm_forward.1} parent=1 // pred_check_branch
      %22 = sbr.rel (0) target = $region13
    $region12: #{uncertain_lstm_forward.1} parent=1 // pred_region
      _
    $region13: #{uncertain_lstm_forward.1} parent=1 // pred_fallthru
      _
    // Predicated region
    $region14: #{uncertain_lstm_forward.1} parent=1 // pred_check
      _
    $region15: #{uncertain_lstm_forward.1} parent=1 // pred_check_branch
      %24 = sbr.rel (0) target = $region17
    $region16: #{uncertain_lstm_forward.1} parent=1 // pred_region
      _
    $region17: #{uncertain_lstm_forward.1} parent=1 // pred_fallthru
      _
    // Predicated region
    $region18: #{uncertain_lstm_forward.1} parent=1 // pred_check
      _
    $region19: #{uncertain_lstm_forward.1} parent=1 // pred_check_branch
      %26 = sbr.rel (0) target = $region21
    $region20: #{uncertain_lstm_forward.1} parent=1 // pred_region
      %s28 = ssub.s32 2048, 2048
      %29 = vsyncadd [#allocation4], %s28
      %s30 = sshll.u32 [#allocation3], 4
      %s31 = int_to_ptr.vmem [resolvable:$true] %s30
      %36 = dma.hbm_to_vmem [thread:$0]  %s4, 2048, %s31, [#allocation4], 256, 256, 16
    $region21: #{uncertain_lstm_forward.1} parent=1 // pred_fallthru
      _
    // Predicated region
    $region22: #{uncertain_lstm_forward.1} parent=1 // pred_check
      _
    $region23: #{uncertain_lstm_forward.1} parent=1 // pred_check_branch
      %38 = sbr.rel (0) target = $region25
    $region24: #{uncertain_lstm_forward.1} parent=1 // pred_region
      _
    $region25: #{uncertain_lstm_forward.1} parent=1 // pred_fallthru
      _
    // Predicated region
    $region26: #{uncertain_lstm_forward.1} parent=1 // pred_check
      _
    $region27: #{uncertain_lstm_forward.1} parent=1 // pred_check_branch
      %40 = sbr.rel (0) target = $region29
    $region28: #{uncertain_lstm_forward.1} parent=1 // pred_region
      _
    $region29: #{uncertain_lstm_forward.1} parent=1 // pred_fallthru
      _
    // Predicated region
    $region30: #{uncertain_lstm_forward.1} parent=1 // pred_check
      _
    $region31: #{uncertain_lstm_forward.1} parent=1 // pred_check_branch
      %42 = sbr.rel (0) target = $region33
    $region32: #{uncertain_lstm_forward.1} parent=1 // pred_region
      _
    $region33: #{uncertain_lstm_forward.1} parent=1 // pred_fallthru
      _
    // Predicated region
    $region34: #{uncertain_lstm_forward.1} parent=1 // pred_check
      _
    $region35: #{uncertain_lstm_forward.1} parent=1 // pred_check_branch
      %44 = sbr.rel (0) target = $region37
    $region36: #{uncertain_lstm_forward.1} parent=1 // pred_region
      _
    $region37: #{uncertain_lstm_forward.1} parent=1 // pred_fallthru
      _
    // Predicated region
    $region38: #{uncertain_lstm_forward.1} parent=1 // pred_check
      _
    $region39: #{uncertain_lstm_forward.1} parent=1 // pred_check_branch
      %46 = sbr.rel (0) target = $region41
    $region40: #{uncertain_lstm_forward.1} parent=1 // pred_region
      _
    $region41: #{uncertain_lstm_forward.1} parent=1 // pred_fallthru
      _
    // Predicated region
    $region42: #{uncertain_lstm_forward.1} parent=1 // pred_check
      _
    $region43: #{uncertain_lstm_forward.1} parent=1 // pred_check_branch
      %48 = sbr.rel (0) target = $region45
    $region44: #{uncertain_lstm_forward.1} parent=1 // pred_region
      _
    $region45: #{uncertain_lstm_forward.1} parent=1 // pred_fallthru
      _
    // Predicated region
    $region46: #{uncertain_lstm_forward.1} parent=1 // pred_check
      _
    $region47: #{uncertain_lstm_forward.1} parent=1 // pred_check_branch
      %50 = sbr.rel (0) target = $region49
    $region48: #{uncertain_lstm_forward.1} parent=1 // pred_region
      %51 = dma.done [#allocation4], 2048
    $region49: #{uncertain_lstm_forward.1} parent=1 // pred_fallthru
      _
    %v52 = vld [vmem:[%s0] sm:$0xff]
    %v53 = vld [vmem:[%s2] sm:$0x1]
    %55 = vset.pattern.permute.xlu0 0
    %56 = vperm.xlu0 %55, %v52
    %v57 = vpop.permute.xlu0 %56
    %v60 = vlaneseq
    %v61 = vshrl.u32 %v60, 7
    %v62 = vsub.s32 0, %v61
    %v63 = vrot.slane %v53, %v62
    %v65 = vmul.f32 %v57, %v63
    %v66 = vld [vmem:[%s3] sm:$0x1]
    %v68 = vlaneseq
    %v69 = vshrl.u32 %v68, 7
    %v70 = vsub.s32 0, %v69
    %v71 = vrot.slane %v66, %v70
    %v73 = vadd.f32 %v65, %v71
    %v74 = vld [vmem:[#allocation3] sm:$0xff]
    %v75 = vld [vmem:[#allocation3 + $0x8] sm:$0xff]
    %v76 = vld [vmem:[#allocation3 + $0x10] sm:$0xff]
    %v77 = vld [vmem:[#allocation3 + $0x18] sm:$0xff]
    %v78 = vld [vmem:[#allocation3 + $0x20] sm:$0xff]
    %v79 = vld [vmem:[#allocation3 + $0x28] sm:$0xff]
    %v80 = vld [vmem:[#allocation3 + $0x30] sm:$0xff]
    %v81 = vld [vmem:[#allocation3 + $0x38] sm:$0xff]
    %v82 = vld [vmem:[#allocation3 + $0x40] sm:$0xff]
    %v83 = vld [vmem:[#allocation3 + $0x48] sm:$0xff]
    %v84 = vld [vmem:[#allocation3 + $0x50] sm:$0xff]
    %v85 = vld [vmem:[#allocation3 + $0x58] sm:$0xff]
    %v86 = vld [vmem:[#allocation3 + $0x60] sm:$0xff]
    %v87 = vld [vmem:[#allocation3 + $0x68] sm:$0xff]
    %v88 = vld [vmem:[#allocation3 + $0x70] sm:$0xff]
    %v89 = vld [vmem:[#allocation3 + $0x78] sm:$0xff]
    %v90 = vld [vmem:[%s5] sm:$0x1]
    %vm91 = vcmask 523264
    %v93 = vsel %vm91, 0.0, 0
    %95 = vmatprep.subr.mxu0 0.0
    %96 = vmatpush1.msra.mxu0 0.0
    %97 = vmatprep.subr.mxu0 0.0
    %98 = vmatpush1.msra.mxu0 0.0
    %99 = vmatprep.subr.mxu0 0.0
    %100 = vmatpush1.msra.mxu0 0.0
    %101 = vmatprep.subr.mxu0 0.0
    %102 = vmatpush1.msra.mxu0 0.0
    %103 = vmatprep.subr.mxu0 0.0
    %104 = vmatpush1.msra.mxu0 0.0
    %105 = vmatprep.subr.mxu0 0.0
    %106 = vmatpush1.msra.mxu0 0.0
    %107 = vmatprep.subr.mxu0 0.0
    %108 = vmatpush1.msra.mxu0 0.0
    %109 = vmatprep.subr.mxu0 0.0
    %110 = vmatpush1.msra.mxu0 0.0
    %111 = vmatprep.subr.mxu0 %v89
    %112 = vmatpush1.msra.mxu0 %v88
    %113 = vmatprep.subr.mxu0 %v87
    %114 = vmatpush1.msra.mxu0 %v86
    %115 = vmatprep.subr.mxu0 %v85
    %116 = vmatpush1.msra.mxu0 %v84
    %117 = vmatprep.subr.mxu0 %v83
    %118 = vmatpush1.msra.mxu0 %v82
    %119 = vmatprep.subr.mxu0 %v81
    %120 = vmatpush1.msra.mxu0 %v80
    %121 = vmatprep.subr.mxu0 %v79
    %122 = vmatpush1.msra.mxu0 %v78
    %123 = vmatprep.subr.mxu0 %v77
    %124 = vmatpush1.msra.mxu0 %v76
    %125 = vmatprep.subr.mxu0 %v75
    %126 = vmatpush1.msra.mxu0 %v74
    %127 = vmatprep.subr.mxu0 0.0
    %128 = vmatpush2.msra.mxu0 0.0
    %129 = vmatprep.subr.mxu0 0.0
    %130 = vmatpush2.msra.mxu0 0.0
    %131 = vmatprep.subr.mxu0 0.0
    %132 = vmatpush2.msra.mxu0 0.0
    %133 = vmatprep.subr.mxu0 0.0
    %134 = vmatpush2.msra.mxu0 0.0
    %135 = vmatprep.subr.mxu0 0.0
    %136 = vmatpush2.msra.mxu0 0.0
    %137 = vmatprep.subr.mxu0 0.0
    %138 = vmatpush2.msra.mxu0 0.0
    %139 = vmatprep.subr.mxu0 0.0
    %140 = vmatpush2.msra.mxu0 0.0
    %141 = vmatprep.subr.mxu0 0.0
    %142 = vmatpush2.msra.mxu0 0.0
    %143 = vmatprep.subr.mxu0 0.0
    %144 = vmatpush2.msra.mxu0 0.0
    %145 = vmatprep.subr.mxu0 0.0
    %146 = vmatpush2.msra.mxu0 0.0
    %147 = vmatprep.subr.mxu0 0.0
    %148 = vmatpush2.msra.mxu0 0.0
    %149 = vmatprep.subr.mxu0 0.0
    %150 = vmatpush2.msra.mxu0 0.0
    %151 = vmatprep.subr.mxu0 0.0
    %152 = vmatpush2.msra.mxu0 0.0
    %153 = vmatprep.subr.mxu0 0.0
    %154 = vmatpush2.msra.mxu0 0.0
    %155 = vmatprep.subr.mxu0 0.0
    %156 = vmatpush2.msra.mxu0 0.0
    %157 = vmatprep.subr.mxu0 0.0
    %158 = vmatpush2.msra.mxu0 0.0
    %159 = vmatprep.mubr.f32.mxu0 0.0
    %160 = vmatmul.mubr.f32.gmra.mxu0 %v93
    %v161 = vpop.f32.mrf.mxu0
    %v162 = vadd.f32 0.0, %v161
    %v163 = vpop.f32.mrf.mxu0
    %164 = vdwg.mxu0
    %v165 = vadd.f32 %v73, %v162
    %v166 = vxor.u32 %v165, 2147483648
    %v167 = vmul.f32 %v166, 1.442695
    %v168 = vpow.pop %v167
    %v169 = vadd.f32 %v168, 1.0
    %v170 = vrcp.pop %v169
    %v171 = vmul.f32 1.0, %v170
    %v172 = vtanh.pop %v165
    %v173 = vmul.f32 %v171, 0.0
    %175 = vrot.lane.b32.xlu0 %v172, 64
    %v176 = vpop.permute.xlu0 %175
    %v178 = vmul.f32 %v171, %v176
    %180 = vrot.lane.b32.xlu0 %v178, 32
    %v181 = vpop.permute.xlu0 %180
    %v183 = vadd.f32 %v173, %v181
    %v184 = vtanh.pop %v183
    %186 = vrot.lane.b32.xlu0 %v184, 64
    %v187 = vpop.permute.xlu0 %186
    %v189 = vmul.f32 %v171, %v187
    %191 = vrot.lane.b32.xlu0 %v189, 32
    %v192 = vpop.permute.xlu0 %191
    %vm194 = vcmask 261120
    %v195 = vsel %vm194, %v192, 0.0
    %v197 = vsel %vm91, %v195, 0
    %199 = vmatprep.subr.mxu0 0.0
    %200 = vmatpush1.msra.mxu0 0.0
    %201 = vmatprep.subr.mxu0 0.0
    %202 = vmatpush1.msra.mxu0 0.0
    %203 = vmatprep.subr.mxu0 0.0
    %204 = vmatpush1.msra.mxu0 0.0
    %205 = vmatprep.subr.mxu0 0.0
    %206 = vmatpush1.msra.mxu0 0.0
    %207 = vmatprep.subr.mxu0 0.0
    %208 = vmatpush1.msra.mxu0 0.0
    %209 = vmatprep.subr.mxu0 0.0
    %210 = vmatpush1.msra.mxu0 0.0
    %211 = vmatprep.subr.mxu0 0.0
    %212 = vmatpush1.msra.mxu0 0.0
    %213 = vmatprep.subr.mxu0 0.0
    %214 = vmatpush1.msra.mxu0 0.0
    %215 = vmatprep.subr.mxu0 %v89
    %216 = vmatpush1.msra.mxu0 %v88
    %217 = vmatprep.subr.mxu0 %v87
    %218 = vmatpush1.msra.mxu0 %v86
    %219 = vmatprep.subr.mxu0 %v85
    %220 = vmatpush1.msra.mxu0 %v84
    %221 = vmatprep.subr.mxu0 %v83
    %222 = vmatpush1.msra.mxu0 %v82
    %223 = vmatprep.subr.mxu0 %v81
    %224 = vmatpush1.msra.mxu0 %v80
    %225 = vmatprep.subr.mxu0 %v79
    %226 = vmatpush1.msra.mxu0 %v78
    %227 = vmatprep.subr.mxu0 %v77
    %228 = vmatpush1.msra.mxu0 %v76
    %229 = vmatprep.subr.mxu0 %v75
    %230 = vmatpush1.msra.mxu0 %v74
    %231 = vmatprep.subr.mxu0 0.0
    %232 = vmatpush2.msra.mxu0 0.0
    %233 = vmatprep.subr.mxu0 0.0
    %234 = vmatpush2.msra.mxu0 0.0
    %235 = vmatprep.subr.mxu0 0.0
    %236 = vmatpush2.msra.mxu0 0.0
    %237 = vmatprep.subr.mxu0 0.0
    %238 = vmatpush2.msra.mxu0 0.0
    %239 = vmatprep.subr.mxu0 0.0
    %240 = vmatpush2.msra.mxu0 0.0
    %241 = vmatprep.subr.mxu0 0.0
    %242 = vmatpush2.msra.mxu0 0.0
    %243 = vmatprep.subr.mxu0 0.0
    %244 = vmatpush2.msra.mxu0 0.0
    %245 = vmatprep.subr.mxu0 0.0
    %246 = vmatpush2.msra.mxu0 0.0
    %247 = vmatprep.subr.mxu0 0.0
    %248 = vmatpush2.msra.mxu0 0.0
    %249 = vmatprep.subr.mxu0 0.0
    %250 = vmatpush2.msra.mxu0 0.0
    %251 = vmatprep.subr.mxu0 0.0
    %252 = vmatpush2.msra.mxu0 0.0
    %253 = vmatprep.subr.mxu0 0.0
    %254 = vmatpush2.msra.mxu0 0.0
    %255 = vmatprep.subr.mxu0 0.0
    %256 = vmatpush2.msra.mxu0 0.0
    %257 = vmatprep.subr.mxu0 0.0
    %258 = vmatpush2.msra.mxu0 0.0
    %259 = vmatprep.subr.mxu0 0.0
    %260 = vmatpush2.msra.mxu0 0.0
    %261 = vmatprep.subr.mxu0 0.0
    %262 = vmatpush2.msra.mxu0 0.0
    %263 = vmatprep.mubr.f32.mxu0 0.0
    %264 = vmatmul.mubr.f32.gmra.mxu0 %v197
    %v265 = vpop.f32.mrf.mxu0
    %v266 = vadd.f32 0.0, %v265
    %v267 = vpop.f32.mrf.mxu0
    %v268 = vadd.f32 0.0, %v267
    %269 = vdwg.mxu0
    %v271 = vrot.slane %v266, 7
    %v273 = vadd.f32 %v73, %v271
    %v274 = vxor.u32 %v273, 2147483648
    %v275 = vmul.f32 %v274, 1.442695
    %v276 = vpow.pop %v275
    %v277 = vadd.f32 %v276, 1.0
    %v278 = vrcp.pop %v277
    %v279 = vmul.f32 1.0, %v278
    %v280 = vtanh.pop %v273
    %v282 = vrot.slane %v183, 7
    %v284 = vmul.f32 %v279, %v282
    %286 = vrot.lane.b32.xlu0 %v280, 64
    %v287 = vpop.permute.xlu0 %286
    %v289 = vmul.f32 %v279, %v287
    %291 = vrot.lane.b32.xlu0 %v289, 32
    %v292 = vpop.permute.xlu0 %291
    %v294 = vadd.f32 %v284, %v292
    %v295 = vtanh.pop %v294
    %297 = vrot.lane.b32.xlu0 %v295, 64
    %v298 = vpop.permute.xlu0 %297
    %v300 = vmul.f32 %v279, %v298
    %v301 = vadd.f32 %v268, %v90
    %v302 = vxor.u32 %v301, 2147483648
    %v303 = vmul.f32 %v302, 1.442695
    %v304 = vpow.pop %v303
    %v305 = vadd.f32 %v304, 1.0
    %v306 = vrcp.pop %v305
    %v307 = vmul.f32 1.0, %v306
    %v308 = vtanh.pop %v301
    %v309 = vmul.f32 %v307, 0.0
    %311 = vrot.lane.b32.xlu0 %v308, 64
    %v312 = vpop.permute.xlu0 %311
    %v314 = vmul.f32 %v307, %v312
    %316 = vrot.lane.b32.xlu0 %v314, 32
    %v317 = vpop.permute.xlu0 %316
    %v319 = vadd.f32 %v309, %v317
    %v320 = vtanh.pop %v319
    %322 = vrot.lane.b32.xlu0 %v320, 64
    %v323 = vpop.permute.xlu0 %322
    %v325 = vmul.f32 %v307, %v323
    %327 = vrot.lane.b32.xlu0 %v325, 32
    %v328 = vpop.permute.xlu0 %327
    %vm330 = vcmask 253952
    %331 = vst.msk [vmem:[#allocation2] sm:$0x1] %vm330, %v328
    %333 = vrot.lane.b32.xlu0 %v300, 32
    %v334 = vpop.permute.xlu0 %333
    %v336 = vrot.slane %v325, 7
    %337 = vrot.lane.b32.xlu0 %v336, 64
    %v338 = vpop.permute.xlu0 %337
    %v340 = vsel %vm194, %v334, %v338
    %v342 = vrot.slane %v340, 1
    %v343 = vsel %vm91, %v342, 0
    %345 = vmatprep.subr.mxu0 0.0
    %346 = vmatpush1.msra.mxu0 0.0
    %347 = vmatprep.subr.mxu0 0.0
    %348 = vmatpush1.msra.mxu0 0.0
    %349 = vmatprep.subr.mxu0 0.0
    %350 = vmatpush1.msra.mxu0 0.0
    %351 = vmatprep.subr.mxu0 0.0
    %352 = vmatpush1.msra.mxu0 0.0
    %353 = vmatprep.subr.mxu0 0.0
    %354 = vmatpush1.msra.mxu0 0.0
    %355 = vmatprep.subr.mxu0 0.0
    %356 = vmatpush1.msra.mxu0 0.0
    %357 = vmatprep.subr.mxu0 0.0
    %358 = vmatpush1.msra.mxu0 0.0
    %359 = vmatprep.subr.mxu0 0.0
    %360 = vmatpush1.msra.mxu0 0.0
    %361 = vmatprep.subr.mxu0 %v89
    %362 = vmatpush1.msra.mxu0 %v88
    %363 = vmatprep.subr.mxu0 %v87
    %364 = vmatpush1.msra.mxu0 %v86
    %365 = vmatprep.subr.mxu0 %v85
    %366 = vmatpush1.msra.mxu0 %v84
    %367 = vmatprep.subr.mxu0 %v83
    %368 = vmatpush1.msra.mxu0 %v82
    %369 = vmatprep.subr.mxu0 %v81
    %370 = vmatpush1.msra.mxu0 %v80
    %371 = vmatprep.subr.mxu0 %v79
    %372 = vmatpush1.msra.mxu0 %v78
    %373 = vmatprep.subr.mxu0 %v77
    %374 = vmatpush1.msra.mxu0 %v76
    %375 = vmatprep.subr.mxu0 %v75
    %376 = vmatpush1.msra.mxu0 %v74
    %377 = vmatprep.subr.mxu0 0.0
    %378 = vmatpush2.msra.mxu0 0.0
    %379 = vmatprep.subr.mxu0 0.0
    %380 = vmatpush2.msra.mxu0 0.0
    %381 = vmatprep.subr.mxu0 0.0
    %382 = vmatpush2.msra.mxu0 0.0
    %383 = vmatprep.subr.mxu0 0.0
    %384 = vmatpush2.msra.mxu0 0.0
    %385 = vmatprep.subr.mxu0 0.0
    %386 = vmatpush2.msra.mxu0 0.0
    %387 = vmatprep.subr.mxu0 0.0
    %388 = vmatpush2.msra.mxu0 0.0
    %389 = vmatprep.subr.mxu0 0.0
    %390 = vmatpush2.msra.mxu0 0.0
    %391 = vmatprep.subr.mxu0 0.0
    %392 = vmatpush2.msra.mxu0 0.0
    %393 = vmatprep.subr.mxu0 0.0
    %394 = vmatpush2.msra.mxu0 0.0
    %395 = vmatprep.subr.mxu0 0.0
    %396 = vmatpush2.msra.mxu0 0.0
    %397 = vmatprep.subr.mxu0 0.0
    %398 = vmatpush2.msra.mxu0 0.0
    %399 = vmatprep.subr.mxu0 0.0
    %400 = vmatpush2.msra.mxu0 0.0
    %401 = vmatprep.subr.mxu0 0.0
    %402 = vmatpush2.msra.mxu0 0.0
    %403 = vmatprep.subr.mxu0 0.0
    %404 = vmatpush2.msra.mxu0 0.0
    %405 = vmatprep.subr.mxu0 0.0
    %406 = vmatpush2.msra.mxu0 0.0
    %407 = vmatprep.subr.mxu0 0.0
    %408 = vmatpush2.msra.mxu0 0.0
    %409 = vmatprep.mubr.f32.mxu0 0.0
    %410 = vmatmul.mubr.f32.gmra.mxu0 %v343
    %v411 = vpop.f32.mrf.mxu0
    %v412 = vadd.f32 0.0, %v411
    %v413 = vpop.f32.mrf.mxu0
    %v414 = vadd.f32 0.0, %v413
    %415 = vdwg.mxu0
    %v417 = vrot.slane %v412, 6
    %v419 = vadd.f32 %v73, %v417
    %v420 = vxor.u32 %v419, 2147483648
    %v421 = vmul.f32 %v420, 1.442695
    %v422 = vpow.pop %v421
    %v423 = vadd.f32 %v422, 1.0
    %v424 = vrcp.pop %v423
    %v425 = vmul.f32 1.0, %v424
    %v426 = vtanh.pop %v419
    %v428 = vrot.slane %v294, 7
    %v430 = vmul.f32 %v425, %v428
    %432 = vrot.lane.b32.xlu0 %v426, 64
    %v433 = vpop.permute.xlu0 %432
    %v435 = vmul.f32 %v425, %v433
    %437 = vrot.lane.b32.xlu0 %v435, 32
    %v438 = vpop.permute.xlu0 %437
    %v440 = vadd.f32 %v430, %v438
    %v441 = vtanh.pop %v440
    %443 = vrot.lane.b32.xlu0 %v441, 64
    %v444 = vpop.permute.xlu0 %443
    %v446 = vmul.f32 %v425, %v444
    %v447 = vadd.f32 %v414, %v90
    %v448 = vxor.u32 %v447, 2147483648
    %v449 = vmul.f32 %v448, 1.442695
    %v450 = vpow.pop %v449
    %v451 = vadd.f32 %v450, 1.0
    %v452 = vrcp.pop %v451
    %v453 = vmul.f32 1.0, %v452
    %v454 = vtanh.pop %v447
    %v455 = vmul.f32 %v453, %v319
    %457 = vrot.lane.b32.xlu0 %v454, 64
    %v458 = vpop.permute.xlu0 %457
    %v460 = vmul.f32 %v453, %v458
    %462 = vrot.lane.b32.xlu0 %v460, 32
    %v463 = vpop.permute.xlu0 %462
    %v465 = vadd.f32 %v455, %v463
    %v466 = vtanh.pop %v465
    %468 = vrot.lane.b32.xlu0 %v466, 64
    %v469 = vpop.permute.xlu0 %468
    %v471 = vmul.f32 %v453, %v469
    %473 = vrot.lane.b32.xlu0 %v471, 32
    %v474 = vpop.permute.xlu0 %473
    %476 = vst.msk [vmem:[#allocation2 + $0x1] sm:$0x1] %vm330, %v474
    %478 = vrot.lane.b32.xlu0 %v446, 32
    %v479 = vpop.permute.xlu0 %478
    %v481 = vrot.slane %v471, 6
    %482 = vrot.lane.b32.xlu0 %v481, 64
    %v483 = vpop.permute.xlu0 %482
    %v485 = vsel %vm194, %v479, %v483
    %v487 = vrot.slane %v485, 2
    %v488 = vsel %vm91, %v487, 0
    %490 = vmatprep.subr.mxu0 0.0
    %491 = vmatpush1.msra.mxu0 0.0
    %492 = vmatprep.subr.mxu0 0.0
    %493 = vmatpush1.msra.mxu0 0.0
    %494 = vmatprep.subr.mxu0 0.0
    %495 = vmatpush1.msra.mxu0 0.0
    %496 = vmatprep.subr.mxu0 0.0
    %497 = vmatpush1.msra.mxu0 0.0
    %498 = vmatprep.subr.mxu0 0.0
    %499 = vmatpush1.msra.mxu0 0.0
    %500 = vmatprep.subr.mxu0 0.0
    %501 = vmatpush1.msra.mxu0 0.0
    %502 = vmatprep.subr.mxu0 0.0
    %503 = vmatpush1.msra.mxu0 0.0
    %504 = vmatprep.subr.mxu0 0.0
    %505 = vmatpush1.msra.mxu0 0.0
    %506 = vmatprep.subr.mxu0 %v89
    %507 = vmatpush1.msra.mxu0 %v88
    %508 = vmatprep.subr.mxu0 %v87
    %509 = vmatpush1.msra.mxu0 %v86
    %510 = vmatprep.subr.mxu0 %v85
    %511 = vmatpush1.msra.mxu0 %v84
    %512 = vmatprep.subr.mxu0 %v83
    %513 = vmatpush1.msra.mxu0 %v82
    %514 = vmatprep.subr.mxu0 %v81
    %515 = vmatpush1.msra.mxu0 %v80
    %516 = vmatprep.subr.mxu0 %v79
    %517 = vmatpush1.msra.mxu0 %v78
    %518 = vmatprep.subr.mxu0 %v77
    %519 = vmatpush1.msra.mxu0 %v76
    %520 = vmatprep.subr.mxu0 %v75
    %521 = vmatpush1.msra.mxu0 %v74
    %522 = vmatprep.subr.mxu0 0.0
    %523 = vmatpush2.msra.mxu0 0.0
    %524 = vmatprep.subr.mxu0 0.0
    %525 = vmatpush2.msra.mxu0 0.0
    %526 = vmatprep.subr.mxu0 0.0
    %527 = vmatpush2.msra.mxu0 0.0
    %528 = vmatprep.subr.mxu0 0.0
    %529 = vmatpush2.msra.mxu0 0.0
    %530 = vmatprep.subr.mxu0 0.0
    %531 = vmatpush2.msra.mxu0 0.0
    %532 = vmatprep.subr.mxu0 0.0
    %533 = vmatpush2.msra.mxu0 0.0
    %534 = vmatprep.subr.mxu0 0.0
    %535 = vmatpush2.msra.mxu0 0.0
    %536 = vmatprep.subr.mxu0 0.0
    %537 = vmatpush2.msra.mxu0 0.0
    %538 = vmatprep.subr.mxu0 0.0
    %539 = vmatpush2.msra.mxu0 0.0
    %540 = vmatprep.subr.mxu0 0.0
    %541 = vmatpush2.msra.mxu0 0.0
    %542 = vmatprep.subr.mxu0 0.0
    %543 = vmatpush2.msra.mxu0 0.0
    %544 = vmatprep.subr.mxu0 0.0
    %545 = vmatpush2.msra.mxu0 0.0
    %546 = vmatprep.subr.mxu0 0.0
    %547 = vmatpush2.msra.mxu0 0.0
    %548 = vmatprep.subr.mxu0 0.0
    %549 = vmatpush2.msra.mxu0 0.0
    %550 = vmatprep.subr.mxu0 0.0
    %551 = vmatpush2.msra.mxu0 0.0
    %552 = vmatprep.subr.mxu0 0.0
    %553 = vmatpush2.msra.mxu0 0.0
    %554 = vmatprep.mubr.f32.mxu0 0.0
    %555 = vmatmul.mubr.f32.gmra.mxu0 %v488
    %v556 = vpop.f32.mrf.mxu0
    %v557 = vadd.f32 0.0, %v556
    %v558 = vpop.f32.mrf.mxu0
    %v559 = vadd.f32 0.0, %v558
    %560 = vdwg.mxu0
    %v562 = vrot.slane %v557, 5
    %v564 = vadd.f32 %v73, %v562
    %v565 = vxor.u32 %v564, 2147483648
    %v566 = vmul.f32 %v565, 1.442695
    %v567 = vpow.pop %v566
    %v568 = vadd.f32 %v567, 1.0
    %v569 = vrcp.pop %v568
    %v570 = vmul.f32 1.0, %v569
    %v571 = vtanh.pop %v564
    %v573 = vrot.slane %v440, 7
    %v575 = vmul.f32 %v570, %v573
    %577 = vrot.lane.b32.xlu0 %v571, 64
    %v578 = vpop.permute.xlu0 %577
    %v580 = vmul.f32 %v570, %v578
    %582 = vrot.lane.b32.xlu0 %v580, 32
    %v583 = vpop.permute.xlu0 %582
    %v585 = vadd.f32 %v575, %v583
    %v586 = vtanh.pop %v585
    %588 = vrot.lane.b32.xlu0 %v586, 64
    %v589 = vpop.permute.xlu0 %588
    %v591 = vmul.f32 %v570, %v589
    %v592 = vadd.f32 %v559, %v90
    %v593 = vxor.u32 %v592, 2147483648
    %v594 = vmul.f32 %v593, 1.442695
    %v595 = vpow.pop %v594
    %v596 = vadd.f32 %v595, 1.0
    %v597 = vrcp.pop %v596
    %v598 = vmul.f32 1.0, %v597
    %v599 = vtanh.pop %v592
    %v600 = vmul.f32 %v598, %v465
    %602 = vrot.lane.b32.xlu0 %v599, 64
    %v603 = vpop.permute.xlu0 %602
    %v605 = vmul.f32 %v598, %v603
    %607 = vrot.lane.b32.xlu0 %v605, 32
    %v608 = vpop.permute.xlu0 %607
    %v610 = vadd.f32 %v600, %v608
    %v611 = vtanh.pop %v610
    %613 = vrot.lane.b32.xlu0 %v611, 64
    %v614 = vpop.permute.xlu0 %613
    %v616 = vmul.f32 %v598, %v614
    %618 = vrot.lane.b32.xlu0 %v616, 32
    %v619 = vpop.permute.xlu0 %618
    %621 = vst.msk [vmem:[#allocation2 + $0x2] sm:$0x1] %vm330, %v619
    %623 = vrot.lane.b32.xlu0 %v591, 32
    %v624 = vpop.permute.xlu0 %623
    %v626 = vrot.slane %v616, 5
    %627 = vrot.lane.b32.xlu0 %v626, 64
    %v628 = vpop.permute.xlu0 %627
    %v630 = vsel %vm194, %v624, %v628
    %v632 = vrot.slane %v630, 3
    %v633 = vsel %vm91, %v632, 0
    %635 = vmatprep.subr.mxu0 0.0
    %636 = vmatpush1.msra.mxu0 0.0
    %637 = vmatprep.subr.mxu0 0.0
    %638 = vmatpush1.msra.mxu0 0.0
    %639 = vmatprep.subr.mxu0 0.0
    %640 = vmatpush1.msra.mxu0 0.0
    %641 = vmatprep.subr.mxu0 0.0
    %642 = vmatpush1.msra.mxu0 0.0
    %643 = vmatprep.subr.mxu0 0.0
    %644 = vmatpush1.msra.mxu0 0.0
    %645 = vmatprep.subr.mxu0 0.0
    %646 = vmatpush1.msra.mxu0 0.0
    %647 = vmatprep.subr.mxu0 0.0
    %648 = vmatpush1.msra.mxu0 0.0
    %649 = vmatprep.subr.mxu0 0.0
    %650 = vmatpush1.msra.mxu0 0.0
    %651 = vmatprep.subr.mxu0 %v89
    %652 = vmatpush1.msra.mxu0 %v88
    %653 = vmatprep.subr.mxu0 %v87
    %654 = vmatpush1.msra.mxu0 %v86
    %655 = vmatprep.subr.mxu0 %v85
    %656 = vmatpush1.msra.mxu0 %v84
    %657 = vmatprep.subr.mxu0 %v83
    %658 = vmatpush1.msra.mxu0 %v82
    %659 = vmatprep.subr.mxu0 %v81
    %660 = vmatpush1.msra.mxu0 %v80
    %661 = vmatprep.subr.mxu0 %v79
    %662 = vmatpush1.msra.mxu0 %v78
    %663 = vmatprep.subr.mxu0 %v77
    %664 = vmatpush1.msra.mxu0 %v76
    %665 = vmatprep.subr.mxu0 %v75
    %666 = vmatpush1.msra.mxu0 %v74
    %667 = vmatprep.subr.mxu0 0.0
    %668 = vmatpush2.msra.mxu0 0.0
    %669 = vmatprep.subr.mxu0 0.0
    %670 = vmatpush2.msra.mxu0 0.0
    %671 = vmatprep.subr.mxu0 0.0
    %672 = vmatpush2.msra.mxu0 0.0
    %673 = vmatprep.subr.mxu0 0.0
    %674 = vmatpush2.msra.mxu0 0.0
    %675 = vmatprep.subr.mxu0 0.0
    %676 = vmatpush2.msra.mxu0 0.0
    %677 = vmatprep.subr.mxu0 0.0
    %678 = vmatpush2.msra.mxu0 0.0
    %679 = vmatprep.subr.mxu0 0.0
    %680 = vmatpush2.msra.mxu0 0.0
    %681 = vmatprep.subr.mxu0 0.0
    %682 = vmatpush2.msra.mxu0 0.0
    %683 = vmatprep.subr.mxu0 0.0
    %684 = vmatpush2.msra.mxu0 0.0
    %685 = vmatprep.subr.mxu0 0.0
    %686 = vmatpush2.msra.mxu0 0.0
    %687 = vmatprep.subr.mxu0 0.0
    %688 = vmatpush2.msra.mxu0 0.0
    %689 = vmatprep.subr.mxu0 0.0
    %690 = vmatpush2.msra.mxu0 0.0
    %691 = vmatprep.subr.mxu0 0.0
    %692 = vmatpush2.msra.mxu0 0.0
    %693 = vmatprep.subr.mxu0 0.0
    %694 = vmatpush2.msra.mxu0 0.0
    %695 = vmatprep.subr.mxu0 0.0
    %696 = vmatpush2.msra.mxu0 0.0
    %697 = vmatprep.subr.mxu0 0.0
    %698 = vmatpush2.msra.mxu0 0.0
    %699 = vmatprep.mubr.f32.mxu0 0.0
    %700 = vmatmul.mubr.f32.gmra.mxu0 %v633
    %v701 = vpop.f32.mrf.mxu0
    %v702 = vadd.f32 0.0, %v701
    %v703 = vpop.f32.mrf.mxu0
    %v704 = vadd.f32 0.0, %v703
    %705 = vdwg.mxu0
    %v707 = vrot.slane %v702, 4
    %v709 = vadd.f32 %v73, %v707
    %v710 = vxor.u32 %v709, 2147483648
    %v711 = vmul.f32 %v710, 1.442695
    %v712 = vpow.pop %v711
    %v713 = vadd.f32 %v712, 1.0
    %v714 = vrcp.pop %v713
    %v715 = vmul.f32 1.0, %v714
    %v716 = vtanh.pop %v709
    %v718 = vrot.slane %v585, 7
    %v720 = vmul.f32 %v715, %v718
    %722 = vrot.lane.b32.xlu0 %v716, 64
    %v723 = vpop.permute.xlu0 %722
    %v725 = vmul.f32 %v715, %v723
    %727 = vrot.lane.b32.xlu0 %v725, 32
    %v728 = vpop.permute.xlu0 %727
    %v730 = vadd.f32 %v720, %v728
    %v731 = vtanh.pop %v730
    %733 = vrot.lane.b32.xlu0 %v731, 64
    %v734 = vpop.permute.xlu0 %733
    %v736 = vmul.f32 %v715, %v734
    %v737 = vadd.f32 %v704, %v90
    %v738 = vxor.u32 %v737, 2147483648
    %v739 = vmul.f32 %v738, 1.442695
    %v740 = vpow.pop %v739
    %v741 = vadd.f32 %v740, 1.0
    %v742 = vrcp.pop %v741
    %v743 = vmul.f32 1.0, %v742
    %v744 = vtanh.pop %v737
    %v745 = vmul.f32 %v743, %v610
    %747 = vrot.lane.b32.xlu0 %v744, 64
    %v748 = vpop.permute.xlu0 %747
    %v750 = vmul.f32 %v743, %v748
    %752 = vrot.lane.b32.xlu0 %v750, 32
    %v753 = vpop.permute.xlu0 %752
    %v755 = vadd.f32 %v745, %v753
    %v756 = vtanh.pop %v755
    %758 = vrot.lane.b32.xlu0 %v756, 64
    %v759 = vpop.permute.xlu0 %758
    %v761 = vmul.f32 %v743, %v759
    %763 = vrot.lane.b32.xlu0 %v761, 32
    %v764 = vpop.permute.xlu0 %763
    %766 = vst.msk [vmem:[#allocation2 + $0x3] sm:$0x1] %vm330, %v764
    %768 = vrot.lane.b32.xlu0 %v736, 32
    %v769 = vpop.permute.xlu0 %768
    %v771 = vrot.slane %v761, 4
    %772 = vrot.lane.b32.xlu0 %v771, 64
    %v773 = vpop.permute.xlu0 %772
    %v775 = vsel %vm194, %v769, %v773
    %v777 = vrot.slane %v775, 4
    %v778 = vsel %vm91, %v777, 0
    %780 = vmatprep.subr.mxu0 0.0
    %781 = vmatpush1.msra.mxu0 0.0
    %782 = vmatprep.subr.mxu0 0.0
    %783 = vmatpush1.msra.mxu0 0.0
    %784 = vmatprep.subr.mxu0 0.0
    %785 = vmatpush1.msra.mxu0 0.0
    %786 = vmatprep.subr.mxu0 0.0
    %787 = vmatpush1.msra.mxu0 0.0
    %788 = vmatprep.subr.mxu0 0.0
    %789 = vmatpush1.msra.mxu0 0.0
    %790 = vmatprep.subr.mxu0 0.0
    %791 = vmatpush1.msra.mxu0 0.0
    %792 = vmatprep.subr.mxu0 0.0
    %793 = vmatpush1.msra.mxu0 0.0
    %794 = vmatprep.subr.mxu0 0.0
    %795 = vmatpush1.msra.mxu0 0.0
    %796 = vmatprep.subr.mxu0 %v89
    %797 = vmatpush1.msra.mxu0 %v88
    %798 = vmatprep.subr.mxu0 %v87
    %799 = vmatpush1.msra.mxu0 %v86
    %800 = vmatprep.subr.mxu0 %v85
    %801 = vmatpush1.msra.mxu0 %v84
    %802 = vmatprep.subr.mxu0 %v83
    %803 = vmatpush1.msra.mxu0 %v82
    %804 = vmatprep.subr.mxu0 %v81
    %805 = vmatpush1.msra.mxu0 %v80
    %806 = vmatprep.subr.mxu0 %v79
    %807 = vmatpush1.msra.mxu0 %v78
    %808 = vmatprep.subr.mxu0 %v77
    %809 = vmatpush1.msra.mxu0 %v76
    %810 = vmatprep.subr.mxu0 %v75
    %811 = vmatpush1.msra.mxu0 %v74
    %812 = vmatprep.subr.mxu0 0.0
    %813 = vmatpush2.msra.mxu0 0.0
    %814 = vmatprep.subr.mxu0 0.0
    %815 = vmatpush2.msra.mxu0 0.0
    %816 = vmatprep.subr.mxu0 0.0
    %817 = vmatpush2.msra.mxu0 0.0
    %818 = vmatprep.subr.mxu0 0.0
    %819 = vmatpush2.msra.mxu0 0.0
    %820 = vmatprep.subr.mxu0 0.0
    %821 = vmatpush2.msra.mxu0 0.0
    %822 = vmatprep.subr.mxu0 0.0
    %823 = vmatpush2.msra.mxu0 0.0
    %824 = vmatprep.subr.mxu0 0.0
    %825 = vmatpush2.msra.mxu0 0.0
    %826 = vmatprep.subr.mxu0 0.0
    %827 = vmatpush2.msra.mxu0 0.0
    %828 = vmatprep.subr.mxu0 0.0
    %829 = vmatpush2.msra.mxu0 0.0
    %830 = vmatprep.subr.mxu0 0.0
    %831 = vmatpush2.msra.mxu0 0.0
    %832 = vmatprep.subr.mxu0 0.0
    %833 = vmatpush2.msra.mxu0 0.0
    %834 = vmatprep.subr.mxu0 0.0
    %835 = vmatpush2.msra.mxu0 0.0
    %836 = vmatprep.subr.mxu0 0.0
    %837 = vmatpush2.msra.mxu0 0.0
    %838 = vmatprep.subr.mxu0 0.0
    %839 = vmatpush2.msra.mxu0 0.0
    %840 = vmatprep.subr.mxu0 0.0
    %841 = vmatpush2.msra.mxu0 0.0
    %842 = vmatprep.subr.mxu0 0.0
    %843 = vmatpush2.msra.mxu0 0.0
    %844 = vmatprep.mubr.f32.mxu0 0.0
    %845 = vmatmul.mubr.f32.gmra.mxu0 %v778
    %v846 = vpop.f32.mrf.mxu0
    %v847 = vadd.f32 0.0, %v846
    %v848 = vpop.f32.mrf.mxu0
    %v849 = vadd.f32 0.0, %v848
    %850 = vdwg.mxu0
    %v852 = vrot.slane %v847, 3
    %v854 = vadd.f32 %v73, %v852
    %v855 = vxor.u32 %v854, 2147483648
    %v856 = vmul.f32 %v855, 1.442695
    %v857 = vpow.pop %v856
    %v858 = vadd.f32 %v857, 1.0
    %v859 = vrcp.pop %v858
    %v860 = vmul.f32 1.0, %v859
    %v861 = vtanh.pop %v854
    %v863 = vrot.slane %v730, 7
    %v865 = vmul.f32 %v860, %v863
    %867 = vrot.lane.b32.xlu0 %v861, 64
    %v868 = vpop.permute.xlu0 %867
    %v870 = vmul.f32 %v860, %v868
    %872 = vrot.lane.b32.xlu0 %v870, 32
    %v873 = vpop.permute.xlu0 %872
    %v875 = vadd.f32 %v865, %v873
    %v876 = vtanh.pop %v875
    %878 = vrot.lane.b32.xlu0 %v876, 64
    %v879 = vpop.permute.xlu0 %878
    %v881 = vmul.f32 %v860, %v879
    %v882 = vadd.f32 %v849, %v90
    %v883 = vxor.u32 %v882, 2147483648
    %v884 = vmul.f32 %v883, 1.442695
    %v885 = vpow.pop %v884
    %v886 = vadd.f32 %v885, 1.0
    %v887 = vrcp.pop %v886
    %v888 = vmul.f32 1.0, %v887
    %v889 = vtanh.pop %v882
    %v890 = vmul.f32 %v888, %v755
    %892 = vrot.lane.b32.xlu0 %v889, 64
    %v893 = vpop.permute.xlu0 %892
    %v895 = vmul.f32 %v888, %v893
    %897 = vrot.lane.b32.xlu0 %v895, 32
    %v898 = vpop.permute.xlu0 %897
    %v900 = vadd.f32 %v890, %v898
    %v901 = vtanh.pop %v900
    %903 = vrot.lane.b32.xlu0 %v901, 64
    %v904 = vpop.permute.xlu0 %903
    %v906 = vmul.f32 %v888, %v904
    %908 = vrot.lane.b32.xlu0 %v906, 32
    %v909 = vpop.permute.xlu0 %908
    %911 = vst.msk [vmem:[#allocation2 + $0x4] sm:$0x1] %vm330, %v909
    %913 = vrot.lane.b32.xlu0 %v881, 32
    %v914 = vpop.permute.xlu0 %913
    %v916 = vrot.slane %v906, 3
    %917 = vrot.lane.b32.xlu0 %v916, 64
    %v918 = vpop.permute.xlu0 %917
    %v920 = vsel %vm194, %v914, %v918
    %v922 = vrot.slane %v920, 5
    %v923 = vsel %vm91, %v922, 0
    %925 = vmatprep.subr.mxu0 0.0
    %926 = vmatpush1.msra.mxu0 0.0
    %927 = vmatprep.subr.mxu0 0.0
    %928 = vmatpush1.msra.mxu0 0.0
    %929 = vmatprep.subr.mxu0 0.0
    %930 = vmatpush1.msra.mxu0 0.0
    %931 = vmatprep.subr.mxu0 0.0
    %932 = vmatpush1.msra.mxu0 0.0
    %933 = vmatprep.subr.mxu0 0.0
    %934 = vmatpush1.msra.mxu0 0.0
    %935 = vmatprep.subr.mxu0 0.0
    %936 = vmatpush1.msra.mxu0 0.0
    %937 = vmatprep.subr.mxu0 0.0
    %938 = vmatpush1.msra.mxu0 0.0
    %939 = vmatprep.subr.mxu0 0.0
    %940 = vmatpush1.msra.mxu0 0.0
    %941 = vmatprep.subr.mxu0 %v89
    %942 = vmatpush1.msra.mxu0 %v88
    %943 = vmatprep.subr.mxu0 %v87
    %944 = vmatpush1.msra.mxu0 %v86
    %945 = vmatprep.subr.mxu0 %v85
    %946 = vmatpush1.msra.mxu0 %v84
    %947 = vmatprep.subr.mxu0 %v83
    %948 = vmatpush1.msra.mxu0 %v82
    %949 = vmatprep.subr.mxu0 %v81
    %950 = vmatpush1.msra.mxu0 %v80
    %951 = vmatprep.subr.mxu0 %v79
    %952 = vmatpush1.msra.mxu0 %v78
    %953 = vmatprep.subr.mxu0 %v77
    %954 = vmatpush1.msra.mxu0 %v76
    %955 = vmatprep.subr.mxu0 %v75
    %956 = vmatpush1.msra.mxu0 %v74
    %957 = vmatprep.subr.mxu0 0.0
    %958 = vmatpush2.msra.mxu0 0.0
    %959 = vmatprep.subr.mxu0 0.0
    %960 = vmatpush2.msra.mxu0 0.0
    %961 = vmatprep.subr.mxu0 0.0
    %962 = vmatpush2.msra.mxu0 0.0
    %963 = vmatprep.subr.mxu0 0.0
    %964 = vmatpush2.msra.mxu0 0.0
    %965 = vmatprep.subr.mxu0 0.0
    %966 = vmatpush2.msra.mxu0 0.0
    %967 = vmatprep.subr.mxu0 0.0
    %968 = vmatpush2.msra.mxu0 0.0
    %969 = vmatprep.subr.mxu0 0.0
    %970 = vmatpush2.msra.mxu0 0.0
    %971 = vmatprep.subr.mxu0 0.0
    %972 = vmatpush2.msra.mxu0 0.0
    %973 = vmatprep.subr.mxu0 0.0
    %974 = vmatpush2.msra.mxu0 0.0
    %975 = vmatprep.subr.mxu0 0.0
    %976 = vmatpush2.msra.mxu0 0.0
    %977 = vmatprep.subr.mxu0 0.0
    %978 = vmatpush2.msra.mxu0 0.0
    %979 = vmatprep.subr.mxu0 0.0
    %980 = vmatpush2.msra.mxu0 0.0
    %981 = vmatprep.subr.mxu0 0.0
    %982 = vmatpush2.msra.mxu0 0.0
    %983 = vmatprep.subr.mxu0 0.0
    %984 = vmatpush2.msra.mxu0 0.0
    %985 = vmatprep.subr.mxu0 0.0
    %986 = vmatpush2.msra.mxu0 0.0
    %987 = vmatprep.subr.mxu0 0.0
    %988 = vmatpush2.msra.mxu0 0.0
    %989 = vmatprep.mubr.f32.mxu0 0.0
    %990 = vmatmul.mubr.f32.gmra.mxu0 %v923
    %v991 = vpop.f32.mrf.mxu0
    %v992 = vadd.f32 0.0, %v991
    %v993 = vpop.f32.mrf.mxu0
    %v994 = vadd.f32 0.0, %v993
    %995 = vdwg.mxu0
    %v997 = vrot.slane %v992, 2
    %v999 = vadd.f32 %v73, %v997
    %v1000 = vxor.u32 %v999, 2147483648
    %v1001 = vmul.f32 %v1000, 1.442695
    %v1002 = vpow.pop %v1001
    %v1003 = vadd.f32 %v1002, 1.0
    %v1004 = vrcp.pop %v1003
    %v1005 = vmul.f32 1.0, %v1004
    %v1006 = vtanh.pop %v999
    %v1008 = vrot.slane %v875, 7
    %v1010 = vmul.f32 %v1005, %v1008
    %1012 = vrot.lane.b32.xlu0 %v1006, 64
    %v1013 = vpop.permute.xlu0 %1012
    %v1015 = vmul.f32 %v1005, %v1013
    %1017 = vrot.lane.b32.xlu0 %v1015, 32
    %v1018 = vpop.permute.xlu0 %1017
    %v1020 = vadd.f32 %v1010, %v1018
    %v1021 = vtanh.pop %v1020
    %1023 = vrot.lane.b32.xlu0 %v1021, 64
    %v1024 = vpop.permute.xlu0 %1023
    %v1026 = vmul.f32 %v1005, %v1024
    %v1027 = vadd.f32 %v994, %v90
    %v1028 = vxor.u32 %v1027, 2147483648
    %v1029 = vmul.f32 %v1028, 1.442695
    %v1030 = vpow.pop %v1029
    %v1031 = vadd.f32 %v1030, 1.0
    %v1032 = vrcp.pop %v1031
    %v1033 = vmul.f32 1.0, %v1032
    %v1034 = vtanh.pop %v1027
    %v1035 = vmul.f32 %v1033, %v900
    %1037 = vrot.lane.b32.xlu0 %v1034, 64
    %v1038 = vpop.permute.xlu0 %1037
    %v1040 = vmul.f32 %v1033, %v1038
    %1042 = vrot.lane.b32.xlu0 %v1040, 32
    %v1043 = vpop.permute.xlu0 %1042
    %v1045 = vadd.f32 %v1035, %v1043
    %v1046 = vtanh.pop %v1045
    %1048 = vrot.lane.b32.xlu0 %v1046, 64
    %v1049 = vpop.permute.xlu0 %1048
    %v1051 = vmul.f32 %v1033, %v1049
    %1053 = vrot.lane.b32.xlu0 %v1051, 32
    %v1054 = vpop.permute.xlu0 %1053
    %1056 = vst.msk [vmem:[#allocation2 + $0x5] sm:$0x1] %vm330, %v1054
    %1058 = vrot.lane.b32.xlu0 %v1026, 32
    %v1059 = vpop.permute.xlu0 %1058
    %v1061 = vrot.slane %v1051, 2
    %1062 = vrot.lane.b32.xlu0 %v1061, 64
    %v1063 = vpop.permute.xlu0 %1062
    %v1065 = vsel %vm194, %v1059, %v1063
    %v1067 = vrot.slane %v1065, 6
    %v1068 = vsel %vm91, %v1067, 0
    %1070 = vmatprep.subr.mxu0 0.0
    %1071 = vmatpush1.msra.mxu0 0.0
    %1072 = vmatprep.subr.mxu0 0.0
    %1073 = vmatpush1.msra.mxu0 0.0
    %1074 = vmatprep.subr.mxu0 0.0
    %1075 = vmatpush1.msra.mxu0 0.0
    %1076 = vmatprep.subr.mxu0 0.0
    %1077 = vmatpush1.msra.mxu0 0.0
    %1078 = vmatprep.subr.mxu0 0.0
    %1079 = vmatpush1.msra.mxu0 0.0
    %1080 = vmatprep.subr.mxu0 0.0
    %1081 = vmatpush1.msra.mxu0 0.0
    %1082 = vmatprep.subr.mxu0 0.0
    %1083 = vmatpush1.msra.mxu0 0.0
    %1084 = vmatprep.subr.mxu0 0.0
    %1085 = vmatpush1.msra.mxu0 0.0
    %1086 = vmatprep.subr.mxu0 %v89
    %1087 = vmatpush1.msra.mxu0 %v88
    %1088 = vmatprep.subr.mxu0 %v87
    %1089 = vmatpush1.msra.mxu0 %v86
    %1090 = vmatprep.subr.mxu0 %v85
    %1091 = vmatpush1.msra.mxu0 %v84
    %1092 = vmatprep.subr.mxu0 %v83
    %1093 = vmatpush1.msra.mxu0 %v82
    %1094 = vmatprep.subr.mxu0 %v81
    %1095 = vmatpush1.msra.mxu0 %v80
    %1096 = vmatprep.subr.mxu0 %v79
    %1097 = vmatpush1.msra.mxu0 %v78
    %1098 = vmatprep.subr.mxu0 %v77
    %1099 = vmatpush1.msra.mxu0 %v76
    %1100 = vmatprep.subr.mxu0 %v75
    %1101 = vmatpush1.msra.mxu0 %v74
    %1102 = vmatprep.subr.mxu0 0.0
    %1103 = vmatpush2.msra.mxu0 0.0
    %1104 = vmatprep.subr.mxu0 0.0
    %1105 = vmatpush2.msra.mxu0 0.0
    %1106 = vmatprep.subr.mxu0 0.0
    %1107 = vmatpush2.msra.mxu0 0.0
    %1108 = vmatprep.subr.mxu0 0.0
    %1109 = vmatpush2.msra.mxu0 0.0
    %1110 = vmatprep.subr.mxu0 0.0
    %1111 = vmatpush2.msra.mxu0 0.0
    %1112 = vmatprep.subr.mxu0 0.0
    %1113 = vmatpush2.msra.mxu0 0.0
    %1114 = vmatprep.subr.mxu0 0.0
    %1115 = vmatpush2.msra.mxu0 0.0
    %1116 = vmatprep.subr.mxu0 0.0
    %1117 = vmatpush2.msra.mxu0 0.0
    %1118 = vmatprep.subr.mxu0 0.0
    %1119 = vmatpush2.msra.mxu0 0.0
    %1120 = vmatprep.subr.mxu0 0.0
    %1121 = vmatpush2.msra.mxu0 0.0
    %1122 = vmatprep.subr.mxu0 0.0
    %1123 = vmatpush2.msra.mxu0 0.0
    %1124 = vmatprep.subr.mxu0 0.0
    %1125 = vmatpush2.msra.mxu0 0.0
    %1126 = vmatprep.subr.mxu0 0.0
    %1127 = vmatpush2.msra.mxu0 0.0
    %1128 = vmatprep.subr.mxu0 0.0
    %1129 = vmatpush2.msra.mxu0 0.0
    %1130 = vmatprep.subr.mxu0 0.0
    %1131 = vmatpush2.msra.mxu0 0.0
    %1132 = vmatprep.subr.mxu0 0.0
    %1133 = vmatpush2.msra.mxu0 0.0
    %1134 = vmatprep.mubr.f32.mxu0 0.0
    %1135 = vmatmul.mubr.f32.gmra.mxu0 %v1068
    %v1136 = vpop.f32.mrf.mxu0
    %v1137 = vadd.f32 0.0, %v1136
    %v1138 = vpop.f32.mrf.mxu0
    %v1139 = vadd.f32 0.0, %v1138
    %1140 = vdwg.mxu0
    %v1142 = vrot.slane %v1137, 1
    %v1144 = vadd.f32 %v73, %v1142
    %v1145 = vxor.u32 %v1144, 2147483648
    %v1146 = vmul.f32 %v1145, 1.442695
    %v1147 = vpow.pop %v1146
    %v1148 = vadd.f32 %v1147, 1.0
    %v1149 = vrcp.pop %v1148
    %v1150 = vmul.f32 1.0, %v1149
    %v1151 = vtanh.pop %v1144
    %v1153 = vrot.slane %v1020, 7
    %v1155 = vmul.f32 %v1150, %v1153
    %1157 = vrot.lane.b32.xlu0 %v1151, 64
    %v1158 = vpop.permute.xlu0 %1157
    %v1160 = vmul.f32 %v1150, %v1158
    %1162 = vrot.lane.b32.xlu0 %v1160, 32
    %v1163 = vpop.permute.xlu0 %1162
    %v1165 = vadd.f32 %v1155, %v1163
    %v1166 = vtanh.pop %v1165
    %1168 = vrot.lane.b32.xlu0 %v1166, 64
    %v1169 = vpop.permute.xlu0 %1168
    %v1171 = vmul.f32 %v1150, %v1169
    %v1172 = vadd.f32 %v1139, %v90
    %v1173 = vxor.u32 %v1172, 2147483648
    %v1174 = vmul.f32 %v1173, 1.442695
    %v1175 = vpow.pop %v1174
    %v1176 = vadd.f32 %v1175, 1.0
    %v1177 = vrcp.pop %v1176
    %v1178 = vmul.f32 1.0, %v1177
    %v1179 = vtanh.pop %v1172
    %v1180 = vmul.f32 %v1178, %v1045
    %1182 = vrot.lane.b32.xlu0 %v1179, 64
    %v1183 = vpop.permute.xlu0 %1182
    %v1185 = vmul.f32 %v1178, %v1183
    %1187 = vrot.lane.b32.xlu0 %v1185, 32
    %v1188 = vpop.permute.xlu0 %1187
    %v1190 = vadd.f32 %v1180, %v1188
    %v1191 = vtanh.pop %v1190
    %1193 = vrot.lane.b32.xlu0 %v1191, 64
    %v1194 = vpop.permute.xlu0 %1193
    %v1196 = vmul.f32 %v1178, %v1194
    %1198 = vrot.lane.b32.xlu0 %v1196, 32
    %v1199 = vpop.permute.xlu0 %1198
    %1201 = vst.msk [vmem:[#allocation2 + $0x6] sm:$0x1] %vm330, %v1199
    %1203 = vrot.lane.b32.xlu0 %v1171, 32
    %v1204 = vpop.permute.xlu0 %1203
    %v1206 = vrot.slane %v1196, 1
    %1207 = vrot.lane.b32.xlu0 %v1206, 64
    %v1208 = vpop.permute.xlu0 %1207
    %v1210 = vsel %vm194, %v1204, %v1208
    %v1212 = vrot.slane %v1210, 7
    %v1213 = vsel %vm91, %v1212, 0
    %1215 = vmatprep.subr.mxu0 0.0
    %1216 = vmatpush1.msra.mxu0 0.0
    %1217 = vmatprep.subr.mxu0 0.0
    %1218 = vmatpush1.msra.mxu0 0.0
    %1219 = vmatprep.subr.mxu0 0.0
    %1220 = vmatpush1.msra.mxu0 0.0
    %1221 = vmatprep.subr.mxu0 0.0
    %1222 = vmatpush1.msra.mxu0 0.0
    %1223 = vmatprep.subr.mxu0 0.0
    %1224 = vmatpush1.msra.mxu0 0.0
    %1225 = vmatprep.subr.mxu0 0.0
    %1226 = vmatpush1.msra.mxu0 0.0
    %1227 = vmatprep.subr.mxu0 0.0
    %1228 = vmatpush1.msra.mxu0 0.0
    %1229 = vmatprep.subr.mxu0 0.0
    %1230 = vmatpush1.msra.mxu0 0.0
    %1231 = vmatprep.subr.mxu0 %v89
    %1232 = vmatpush1.msra.mxu0 %v88
    %1233 = vmatprep.subr.mxu0 %v87
    %1234 = vmatpush1.msra.mxu0 %v86
    %1235 = vmatprep.subr.mxu0 %v85
    %1236 = vmatpush1.msra.mxu0 %v84
    %1237 = vmatprep.subr.mxu0 %v83
    %1238 = vmatpush1.msra.mxu0 %v82
    %1239 = vmatprep.subr.mxu0 %v81
    %1240 = vmatpush1.msra.mxu0 %v80
    %1241 = vmatprep.subr.mxu0 %v79
    %1242 = vmatpush1.msra.mxu0 %v78
    %1243 = vmatprep.subr.mxu0 %v77
    %1244 = vmatpush1.msra.mxu0 %v76
    %1245 = vmatprep.subr.mxu0 %v75
    %1246 = vmatpush1.msra.mxu0 %v74
    %1247 = vmatprep.subr.mxu0 0.0
    %1248 = vmatpush2.msra.mxu0 0.0
    %1249 = vmatprep.subr.mxu0 0.0
    %1250 = vmatpush2.msra.mxu0 0.0
    %1251 = vmatprep.subr.mxu0 0.0
    %1252 = vmatpush2.msra.mxu0 0.0
    %1253 = vmatprep.subr.mxu0 0.0
    %1254 = vmatpush2.msra.mxu0 0.0
    %1255 = vmatprep.subr.mxu0 0.0
    %1256 = vmatpush2.msra.mxu0 0.0
    %1257 = vmatprep.subr.mxu0 0.0
    %1258 = vmatpush2.msra.mxu0 0.0
    %1259 = vmatprep.subr.mxu0 0.0
    %1260 = vmatpush2.msra.mxu0 0.0
    %1261 = vmatprep.subr.mxu0 0.0
    %1262 = vmatpush2.msra.mxu0 0.0
    %1263 = vmatprep.subr.mxu0 0.0
    %1264 = vmatpush2.msra.mxu0 0.0
    %1265 = vmatprep.subr.mxu0 0.0
    %1266 = vmatpush2.msra.mxu0 0.0
    %1267 = vmatprep.subr.mxu0 0.0
    %1268 = vmatpush2.msra.mxu0 0.0
    %1269 = vmatprep.subr.mxu0 0.0
    %1270 = vmatpush2.msra.mxu0 0.0
    %1271 = vmatprep.subr.mxu0 0.0
    %1272 = vmatpush2.msra.mxu0 0.0
    %1273 = vmatprep.subr.mxu0 0.0
    %1274 = vmatpush2.msra.mxu0 0.0
    %1275 = vmatprep.subr.mxu0 0.0
    %1276 = vmatpush2.msra.mxu0 0.0
    %1277 = vmatprep.subr.mxu0 0.0
    %1278 = vmatpush2.msra.mxu0 0.0
    %1279 = vmatprep.mubr.f32.mxu0 0.0
    %1280 = vmatmul.mubr.f32.gmra.mxu0 %v1213
    %v1281 = vpop.f32.mrf.mxu0
    %v1282 = vpop.f32.mrf.mxu0
    %v1283 = vadd.f32 0.0, %v1282
    %1284 = vdwg.mxu0
    %v1285 = vadd.f32 %v1283, %v90
    %v1286 = vxor.u32 %v1285, 2147483648
    %v1287 = vmul.f32 %v1286, 1.442695
    %v1288 = vpow.pop %v1287
    %v1289 = vadd.f32 %v1288, 1.0
    %v1290 = vrcp.pop %v1289
    %v1291 = vmul.f32 1.0, %v1290
    %v1292 = vtanh.pop %v1285
    %v1293 = vmul.f32 %v1291, %v1190
    %1295 = vrot.lane.b32.xlu0 %v1292, 64
    %v1296 = vpop.permute.xlu0 %1295
    %v1298 = vmul.f32 %v1291, %v1296
    %1300 = vrot.lane.b32.xlu0 %v1298, 32
    %v1301 = vpop.permute.xlu0 %1300
    %v1303 = vadd.f32 %v1293, %v1301
    %v1304 = vtanh.pop %v1303
    %1306 = vrot.lane.b32.xlu0 %v1304, 64
    %v1307 = vpop.permute.xlu0 %1306
    %v1309 = vmul.f32 %v1291, %v1307
    %1311 = vrot.lane.b32.xlu0 %v1309, 32
    %v1312 = vpop.permute.xlu0 %1311
    %1314 = vst.msk [vmem:[#allocation2 + $0x7] sm:$0x1] %vm330, %v1312
    %v1315 = vld [vmem:[#allocation2] sm:$0xff]
    %v1316 = vld [vmem:[%s6] sm:$0xff]
    %v1317 = vld [vmem:[%s6 + $0x8] sm:$0xff]
    %v1318 = vld [vmem:[%s6 + $0x10] sm:$0xff]
    %v1319 = vld [vmem:[%s6 + $0x18] sm:$0xff]
    %v1320 = vld [vmem:[%s1] sm:$0xff]
    %v1321 = vld [vmem:[%s7] sm:$0x7]
    %vm1322 = vcmask 23552
    %v1324 = vsel %vm1322, %v1320, 0
    %vm1326 = vcmask 1042432
    %v1328 = vsel %vm1326, %v1321, 0
    %1330 = vmatprep.subr.mxu0 0.0
    %1331 = vmatpush1.msra.mxu0 0.0
    %1332 = vmatprep.subr.mxu0 0.0
    %1333 = vmatpush1.msra.mxu0 0.0
    %1334 = vmatprep.subr.mxu0 0.0
    %1335 = vmatpush1.msra.mxu0 0.0
    %1336 = vmatprep.subr.mxu0 0.0
    %1337 = vmatpush1.msra.mxu0 0.0
    %1338 = vmatprep.subr.mxu0 0.0
    %1339 = vmatpush1.msra.mxu0 0.0
    %1340 = vmatprep.subr.mxu0 0.0
    %1341 = vmatpush1.msra.mxu0 0.0
    %1342 = vmatprep.subr.mxu0 0.0
    %1343 = vmatpush1.msra.mxu0 0.0
    %1344 = vmatprep.subr.mxu0 0.0
    %1345 = vmatpush1.msra.mxu0 0.0
    %1346 = vmatprep.subr.mxu0 0.0
    %1347 = vmatpush1.msra.mxu0 0.0
    %1348 = vmatprep.subr.mxu0 0.0
    %1349 = vmatpush1.msra.mxu0 0.0
    %1350 = vmatprep.subr.mxu0 0.0
    %1351 = vmatpush1.msra.mxu0 0.0
    %1352 = vmatprep.subr.mxu0 0.0
    %1353 = vmatpush1.msra.mxu0 0.0
    %1354 = vmatprep.subr.mxu0 0.0
    %1355 = vmatpush1.msra.mxu0 0.0
    %1356 = vmatprep.subr.mxu0 0.0
    %1357 = vmatpush1.msra.mxu0 0.0
    %1358 = vmatprep.subr.mxu0 0.0
    %1359 = vmatpush1.msra.mxu0 0.0
    %1360 = vmatprep.subr.mxu0 0.0
    %1361 = vmatpush1.msra.mxu0 %v1328
    %1362 = vmatprep.subr.mxu0 0.0
    %1363 = vmatpush2.msra.mxu0 0.0
    %1364 = vmatprep.subr.mxu0 0.0
    %1365 = vmatpush2.msra.mxu0 0.0
    %1366 = vmatprep.subr.mxu0 0.0
    %1367 = vmatpush2.msra.mxu0 0.0
    %1368 = vmatprep.subr.mxu0 0.0
    %1369 = vmatpush2.msra.mxu0 0.0
    %1370 = vmatprep.subr.mxu0 0.0
    %1371 = vmatpush2.msra.mxu0 0.0
    %1372 = vmatprep.subr.mxu0 0.0
    %1373 = vmatpush2.msra.mxu0 0.0
    %1374 = vmatprep.subr.mxu0 0.0
    %1375 = vmatpush2.msra.mxu0 0.0
    %1376 = vmatprep.subr.mxu0 0.0
    %1377 = vmatpush2.msra.mxu0 0.0
    %1378 = vmatprep.subr.mxu0 0.0
    %1379 = vmatpush2.msra.mxu0 0.0
    %1380 = vmatprep.subr.mxu0 0.0
    %1381 = vmatpush2.msra.mxu0 0.0
    %1382 = vmatprep.subr.mxu0 0.0
    %1383 = vmatpush2.msra.mxu0 0.0
    %1384 = vmatprep.subr.mxu0 0.0
    %1385 = vmatpush2.msra.mxu0 0.0
    %1386 = vmatprep.subr.mxu0 0.0
    %1387 = vmatpush2.msra.mxu0 0.0
    %1388 = vmatprep.subr.mxu0 0.0
    %1389 = vmatpush2.msra.mxu0 0.0
    %1390 = vmatprep.subr.mxu0 0.0
    %1391 = vmatpush2.msra.mxu0 0.0
    %1392 = vmatprep.subr.mxu0 0.0
    %1393 = vmatpush2.msra.mxu0 0.0
    %1394 = vmatprep.mubr.f32.mxu0 0.0
    %1395 = vmatmul.mubr.f32.gmra.mxu0 %v1324
    %v1396 = vpop.f32.mrf.mxu0
    %v1397 = vadd.f32 0.0, %v1396
    %v1398 = vpop.f32.mrf.mxu0
    %1399 = vdwg.mxu0
    %v1401 = vsel %vm194, %v1315, 0
    %1403 = vmatprep.subr.mxu0 0.0
    %1404 = vmatpush1.msra.mxu0 0.0
    %1405 = vmatprep.subr.mxu0 0.0
    %1406 = vmatpush1.msra.mxu0 0.0
    %1407 = vmatprep.subr.mxu0 0.0
    %1408 = vmatpush1.msra.mxu0 0.0
    %1409 = vmatprep.subr.mxu0 0.0
    %1410 = vmatpush1.msra.mxu0 0.0
    %1411 = vmatprep.subr.mxu0 0.0
    %1412 = vmatpush1.msra.mxu0 0.0
    %1413 = vmatprep.subr.mxu0 0.0
    %1414 = vmatpush1.msra.mxu0 0.0
    %1415 = vmatprep.subr.mxu0 0.0
    %1416 = vmatpush1.msra.mxu0 0.0
    %1417 = vmatprep.subr.mxu0 0.0
    %1418 = vmatpush1.msra.mxu0 0.0
    %1419 = vmatprep.subr.mxu0 0.0
    %1420 = vmatpush1.msra.mxu0 0.0
    %1421 = vmatprep.subr.mxu0 0.0
    %1422 = vmatpush1.msra.mxu0 0.0
    %1423 = vmatprep.subr.mxu0 0.0
    %1424 = vmatpush1.msra.mxu0 0.0
    %1425 = vmatprep.subr.mxu0 0.0
    %1426 = vmatpush1.msra.mxu0 0.0
    %1427 = vmatprep.subr.mxu0 0.0
    %1428 = vmatpush1.msra.mxu0 %v1319
    %1429 = vmatprep.subr.mxu0 0.0
    %1430 = vmatpush1.msra.mxu0 %v1318
    %1431 = vmatprep.subr.mxu0 0.0
    %1432 = vmatpush1.msra.mxu0 %v1317
    %1433 = vmatprep.subr.mxu0 0.0
    %1434 = vmatpush1.msra.mxu0 %v1316
    %1435 = vmatprep.subr.mxu0 0.0
    %1436 = vmatpush2.msra.mxu0 0.0
    %1437 = vmatprep.subr.mxu0 0.0
    %1438 = vmatpush2.msra.mxu0 0.0
    %1439 = vmatprep.subr.mxu0 0.0
    %1440 = vmatpush2.msra.mxu0 0.0
    %1441 = vmatprep.subr.mxu0 0.0
    %1442 = vmatpush2.msra.mxu0 0.0
    %1443 = vmatprep.subr.mxu0 0.0
    %1444 = vmatpush2.msra.mxu0 0.0
    %1445 = vmatprep.subr.mxu0 0.0
    %1446 = vmatpush2.msra.mxu0 0.0
    %1447 = vmatprep.subr.mxu0 0.0
    %1448 = vmatpush2.msra.mxu0 0.0
    %1449 = vmatprep.subr.mxu0 0.0
    %1450 = vmatpush2.msra.mxu0 0.0
    %1451 = vmatprep.subr.mxu0 0.0
    %1452 = vmatpush2.msra.mxu0 0.0
    %1453 = vmatprep.subr.mxu0 0.0
    %1454 = vmatpush2.msra.mxu0 0.0
    %1455 = vmatprep.subr.mxu0 0.0
    %1456 = vmatpush2.msra.mxu0 0.0
    %1457 = vmatprep.subr.mxu0 0.0
    %1458 = vmatpush2.msra.mxu0 0.0
    %1459 = vmatprep.subr.mxu0 0.0
    %1460 = vmatpush2.msra.mxu0 0.0
    %1461 = vmatprep.subr.mxu0 0.0
    %1462 = vmatpush2.msra.mxu0 0.0
    %1463 = vmatprep.subr.mxu0 0.0
    %1464 = vmatpush2.msra.mxu0 0.0
    %1465 = vmatprep.subr.mxu0 0.0
    %1466 = vmatpush2.msra.mxu0 0.0
    %1467 = vmatprep.mubr.f32.mxu0 0.0
    %1468 = vmatmul.mubr.f32.gmra.mxu0 %v1401
    %v1469 = vpop.f32.mrf.mxu0
    %v1470 = vadd.f32 %v1397, %v1469
    %v1471 = vpop.f32.mrf.mxu0
    %1472 = vdwg.mxu0
    %v1473 = vld [vmem:[%s8] sm:$0x1]
    %v1475 = vlaneseq
    %v1476 = vshrl.u32 %v1475, 7
    %v1477 = vsub.s32 0, %v1476
    %v1478 = vrot.slane %v1473, %v1477
    %v1480 = vadd.f32 %v1470, %v1478
    %v1481 = vmax.f32 %v1480, 0.0
    %v1482 = vld [vmem:[%s9] sm:$0xff]
    %v1483 = vld [vmem:[%s9 + $0x8] sm:$0xff]
    %v1484 = vld [vmem:[%s9 + $0x10] sm:$0xff]
    %v1485 = vld [vmem:[%s9 + $0x18] sm:$0xff]
    %v1486 = vld [vmem:[%s10] sm:$0x1]
    %v1488 = vlaneseq
    %v1489 = vshrl.u32 %v1488, 7
    %v1490 = vsub.s32 0, %v1489
    %v1491 = vrot.slane %v1486, %v1490
    %v1494 = vsel %vm194, %v1481, 0
    %1496 = vmatprep.subr.mxu0 0.0
    %1497 = vmatpush1.msra.mxu0 0.0
    %1498 = vmatprep.subr.mxu0 0.0
    %1499 = vmatpush1.msra.mxu0 0.0
    %1500 = vmatprep.subr.mxu0 0.0
    %1501 = vmatpush1.msra.mxu0 0.0
    %1502 = vmatprep.subr.mxu0 0.0
    %1503 = vmatpush1.msra.mxu0 0.0
    %1504 = vmatprep.subr.mxu0 0.0
    %1505 = vmatpush1.msra.mxu0 0.0
    %1506 = vmatprep.subr.mxu0 0.0
    %1507 = vmatpush1.msra.mxu0 0.0
    %1508 = vmatprep.subr.mxu0 0.0
    %1509 = vmatpush1.msra.mxu0 0.0
    %1510 = vmatprep.subr.mxu0 0.0
    %1511 = vmatpush1.msra.mxu0 0.0
    %1512 = vmatprep.subr.mxu0 0.0
    %1513 = vmatpush1.msra.mxu0 0.0
    %1514 = vmatprep.subr.mxu0 0.0
    %1515 = vmatpush1.msra.mxu0 0.0
    %1516 = vmatprep.subr.mxu0 0.0
    %1517 = vmatpush1.msra.mxu0 0.0
    %1518 = vmatprep.subr.mxu0 0.0
    %1519 = vmatpush1.msra.mxu0 0.0
    %1520 = vmatprep.subr.mxu0 0.0
    %1521 = vmatpush1.msra.mxu0 %v1485
    %1522 = vmatprep.subr.mxu0 0.0
    %1523 = vmatpush1.msra.mxu0 %v1484
    %1524 = vmatprep.subr.mxu0 0.0
    %1525 = vmatpush1.msra.mxu0 %v1483
    %1526 = vmatprep.subr.mxu0 0.0
    %1527 = vmatpush1.msra.mxu0 %v1482
    %1528 = vmatprep.subr.mxu0 0.0
    %1529 = vmatpush2.msra.mxu0 0.0
    %1530 = vmatprep.subr.mxu0 0.0
    %1531 = vmatpush2.msra.mxu0 0.0
    %1532 = vmatprep.subr.mxu0 0.0
    %1533 = vmatpush2.msra.mxu0 0.0
    %1534 = vmatprep.subr.mxu0 0.0
    %1535 = vmatpush2.msra.mxu0 0.0
    %1536 = vmatprep.subr.mxu0 0.0
    %1537 = vmatpush2.msra.mxu0 0.0
    %1538 = vmatprep.subr.mxu0 0.0
    %1539 = vmatpush2.msra.mxu0 0.0
    %1540 = vmatprep.subr.mxu0 0.0
    %1541 = vmatpush2.msra.mxu0 0.0
    %1542 = vmatprep.subr.mxu0 0.0
    %1543 = vmatpush2.msra.mxu0 0.0
    %1544 = vmatprep.subr.mxu0 0.0
    %1545 = vmatpush2.msra.mxu0 0.0
    %1546 = vmatprep.subr.mxu0 0.0
    %1547 = vmatpush2.msra.mxu0 0.0
    %1548 = vmatprep.subr.mxu0 0.0
    %1549 = vmatpush2.msra.mxu0 0.0
    %1550 = vmatprep.subr.mxu0 0.0
    %1551 = vmatpush2.msra.mxu0 0.0
    %1552 = vmatprep.subr.mxu0 0.0
    %1553 = vmatpush2.msra.mxu0 0.0
    %1554 = vmatprep.subr.mxu0 0.0
    %1555 = vmatpush2.msra.mxu0 0.0
    %1556 = vmatprep.subr.mxu0 0.0
    %1557 = vmatpush2.msra.mxu0 0.0
    %1558 = vmatprep.subr.mxu0 0.0
    %1559 = vmatpush2.msra.mxu0 0.0
    %1560 = vmatprep.mubr.f32.mxu0 0.0
    %1561 = vmatmul.mubr.f32.gmra.mxu0 %v1494
    %v1562 = vpop.f32.mrf.mxu0
    %v1563 = vadd.f32 %v1491, %v1562
    %v1564 = vpop.f32.mrf.mxu0
    %1565 = vdwg.mxu0
    %v1566 = vlaneseq
    %v1567 = vand.u32 %v1566, 127
    %vm1568 = vcmp.eq.s32.totalorder %v1567, 0
    %v1569 = vtanh.pop %v1563
    %v1570 = vmax.f32 %v1563, 0.0
    %vm1571 = vcmp.ne.f32.partialorder %v1563, %v1563
    %v1572 = vadd.f32 %v1563, 0.0
    %v1573 = vand.u32 2147483647, %v1563
    %v1574 = vsub.f32 0.0, %v1573
    %v1575 = vmul.f32 %v1574, 1.442695
    %v1576 = vpow.pop %v1575
    %v1577 = vadd.f32 %v1576, 1.0
    %v1578 = vlog2.pop %v1577
    %v1579 = vmul.f32 %v1578, 0.6931472
    %v1580 = vmul.f32 -0.5, %v1576
    %v1581 = vadd.f32 %v1580, 1.0
    %v1582 = vmul.f32 %v1581, %v1576
    %v1583 = vand.u32 2147483647, %v1576
    %vm1584 = vcmp.lt.f32.partialorder %v1583, 0.0004427343
    %v1585 = vsel %vm1584, %v1582, %v1579
    %v1586 = vadd.f32 %v1570, %v1585
    %v1587 = vsel %vm1571, %v1572, %v1586
    %v1588 = vadd.f32 %v1587, 1e-05
    %v1589 = vsel %vm1568, %v1569, %v1588
    %vm1590 = vcmask 15360
    %1591 = vst.msk [vmem:[%s11] sm:$0xff] %vm1590, %v1589
    // Predicated region
    $region50: #{uncertain_lstm_forward.1} parent=1 // pred_check
      _
    $region51: #{uncertain_lstm_forward.1} parent=1 // pred_check_branch
      %1593 = sbr.rel (0) target = $region53
    $region52: #{uncertain_lstm_forward.1} parent=1 // pred_region
      _
    $region53: #{uncertain_lstm_forward.1} parent=1 // pred_fallthru
      _
    // Predicated region
    $region54: #{uncertain_lstm_forward.1} parent=1 // pred_check
      _
    $region55: #{uncertain_lstm_forward.1} parent=1 // pred_check_branch
      %1595 = sbr.rel (0) target = $region57
    $region56: #{uncertain_lstm_forward.1} parent=1 // pred_region
      _
    $region57: #{uncertain_lstm_forward.1} parent=1 // pred_fallthru
      _
    %1596 = vsyncpa [#allocation4], 1

</llo_original>
